<compile_context>
chip_gen: v6e
topology: v6e:2x2x1
jax: 0.10.0
libtpu: 0.0.40
codegen_flags: <defaults>
</compile_context>

<pallas_src>
import functools

import jax
import jax.numpy as jnp
from jax.experimental import pallas as pl
from jax.experimental.pallas import tpu as pltpu

EPS = 1e-5        # PyTorch BatchNorm1d default
KSIZE = 3         # kernel_size=3, padding=1, stride=1 -> same-length output
LANES = 128
MAX_ROWS = 4096   # cap on rows (= block_n * L) per grid step


# ----------------------------- in-kernel helpers ----------------------------------------

def _conv3(a3, w_ref):
    """Per-tap conv as three MXU matmuls (no im2col concat).

    a3:    (tile_n, L, Cp) activations in the MXU dtype (bf16 or f32).
    w_ref: (3, Cp, Cp) ref, tap-major, each tap (Cin, Cout).
    Returns (tile_n*L, Cp) float32 (MXU accumulation stays f32)."""
    tn, length, cp = a3.shape
    rows = tn * length
    zero = jnp.zeros((tn, 1, cp), a3.dtype)
    # halo rows are per-sequence (no cross-batch wraparound), built in compute_dtype
    prev = jnp.concatenate([zero, a3[:, :length - 1, :]], axis=1).reshape(rows, cp)
    nxt = jnp.concatenate([a3[:, 1:, :], zero], axis=1).reshape(rows, cp)
    cur = a3.reshape(rows, cp)
    y = jnp.dot(prev, w_ref[0], preferred_element_type=jnp.float32)
    y = y + jnp.dot(cur, w_ref[1], preferred_element_type=jnp.float32)
    y = y + jnp.dot(nxt, w_ref[2], preferred_element_type=jnp.float32)
    return y


def _accum_stats(stats_ref, y):
    """Accumulate per-channel (sum, sumsq) of y (rows, Cp) into this core's (1,2,Cp) block."""
    @pl.when(pl.program_id(1) == 0)
    def _():
        stats_ref[...] = jnp.zeros_like(stats_ref)

    stats_ref[0, 0:1, :] += jnp.sum(y, axis=0, keepdims=True)
    stats_ref[0, 1:2, :] += jnp.sum(y * y, axis=0, keepdims=True)


# ----------------------------------- kernels --------------------------------------------

def _conv1_kernel(x_ref, w_ref, b_ref, y_ref, stats_ref):
    tn, length, cp = x_ref.shape
    y = _conv3(x_ref[...], w_ref) + b_ref[...]                 # (rows, Cp) f32, +bias
    y_ref[...] = y.reshape(tn, length, cp).astype(y_ref.dtype)
    _accum_stats(stats_ref, y)


def _conv2_kernel(y1_ref, w_ref, aff1_ref, y2_ref, stats_ref):
    tn, length, cp = y1_ref.shape
    rows = tn * length
    a = y1_ref[...].astype(jnp.float32).reshape(rows, cp)
    a = jnp.maximum(a * aff1_ref[0:1, :] + aff1_ref[1:2, :], 0.0)   # bn1 + relu in f32
    a3 = a.astype(y1_ref.dtype).reshape(tn, length, cp)             # one cast to MXU dtype
    z = _conv3(a3, w_ref)                                           # conv2 (no bias)
    y2_ref[...] = z.reshape(tn, length, cp).astype(y2_ref.dtype)
    _accum_stats(stats_ref, z)


def _finalize_kernel(stats_ref, g_ref, b_ref, aff_ref, *, total_rows):
    """Combine per-core (sum, sumsq) partials into the fused BN affine (scale, shift)."""
    tot = jnp.sum(stats_ref[...], axis=0)                      # (2, Cp)
    mean = tot[0:1, :] / total_rows
    var = jnp.maximum(tot[1:2, :] / total_rows - mean * mean, 0.0)   # clamp: no NaN rsqrt
    scale = g_ref[...] * jax.lax.rsqrt(var + EPS)
    aff_ref[0:1, :] = scale
    aff_ref[1:2, :] = b_ref[...] - mean * scale


def _bn_residual_kernel(y2_ref, aff2_ref, x_ref, o_ref):
    tn, length, cp = y2_ref.shape
    rows = tn * length
    z = y2_ref[...].astype(jnp.float32).reshape(rows, cp)
    x = x_ref[...].astype(jnp.float32).reshape(rows, cp)
    out = jnp.maximum(z * aff2_ref[0:1, :] + aff2_ref[1:2, :] + x, 0.0)
    o_ref[...] = out.reshape(tn, length, cp).astype(o_ref.dtype)


# ----------------------------------- wrapper ---------------------------------------------

def _vmem_limit_bytes():
    """~3/4 of physical VMEM: 96 MiB on v5e/v6e (128 MiB), 48 MiB on v7x (64 MiB)."""
    cap = 64 * 1024 * 1024
    try:
        cap = int(getattr(pltpu.get_tpu_info(), "vmem_capacity_bytes", cap))
    except Exception:
        pass
    return max(32 * 1024 * 1024, (cap * 3) // 4)


def basic_block(x_ncl, params, *, compute_dtype=jnp.bfloat16, out_dtype=None, block_n=None):
    """x_ncl: (N, C, L) float32, PyTorch layout. Returns (N, C, L) in out_dtype.

    compute_dtype: dtype fed to the MXU and stored for intermediate activations
      (accumulation and all BN math stay f32). Use jnp.float32 for bit-fidelity / v5e.
    out_dtype: final store dtype (defaults to compute_dtype; the epilogue is HBM-bound).
    """
    w1, b1, g1, be1, w2, g2, be2 = params
    n, c, length = x_ncl.shape
    if out_dtype is None:
        out_dtype = compute_dtype
    cp = ((c + LANES - 1) // LANES) * LANES
    bcd = jnp.dtype(compute_dtype).itemsize
    vmem_limit = _vmem_limit_bytes()

    # channels-last + lane padding (conv length padding handled inside the kernels).
    # TODO(synk): keep activations channels-last (N, L, C) across the surrounding model so
    # these entry/exit transposes (two full HBM round trips) disappear.
    # TODO(synk): for C << 128 a C-on-sublanes / L-on-lanes layout avoids the ~Cp/C x padding
    # waste on the 256-wide v6e/v7x MXU; current layout is right for C >= 128.
    x_nlc = jnp.transpose(x_ncl, (0, 2, 1))
    x_p = jnp.pad(x_nlc, ((0, 0), (0, 0), (0, cp - c))).astype(compute_dtype)

    def pack_conv(w):                     # PyTorch (Cout, Cin, K) -> (K, Cp, Cp) tap-major
        wk = jnp.transpose(w, (2, 1, 0))
        wk = jnp.pad(wk, ((0, 0), (0, cp - c), (0, cp - c)))
        return wk.astype(compute_dtype)

    def pack_vec(v):
        return jnp.pad(v, (0, cp - c)).reshape(1, cp).astype(jnp.float32)

    w1_p, w2_p = pack_conv(w1), pack_conv(w2)
    b1_p, g1_p, be1_p, g2_p, be2_p = map(pack_vec, (b1, g1, be1, g2, be2))

    # ---- tile selection: largest divisor of N whose rows fit the per-step VMEM model ----
    if block_n is None:
        weight_bytes = 2 * KSIZE * cp * cp * bcd                   # double-buffered weights
        # in/out tiles (2-buf each) + prev/nxt copies in compute dtype + f32 acc + f32 bn tmp
        per_row = cp * (6 * bcd + 8)
        budget = max((vmem_limit // 2) - weight_bytes, per_row * length)
        max_rows = min(MAX_ROWS, max(budget // per_row, length))
        cap_n = max(1, min(n, max_rows // length))
        block_n = 1
        for d in range(cap_n, 0, -1):
            if n % d == 0:
                block_n = d
                break
    block_n = max(1, min(int(block_n), n))
    while n % block_n:                                             # guard bad user values
        block_n -= 1

    num_tiles = n // block_n
    ncores = 2 if (num_tiles >= 2 and num_tiles % 2 == 0) else 1   # v7x has 2 TCs/chip
    tiles_per_core = num_tiles // ncores
    total_rows = float(n * length)

    # ---- specs ----
    grid12 = (ncores, tiles_per_core)
    act_spec12 = pl.BlockSpec((block_n, length, cp),
                              lambda cc, t: (cc * tiles_per_core + t, 0, 0))
    w_spec = pl.BlockSpec((KSIZE, cp, cp), lambda cc, t: (0, 0, 0))
    vec_spec12 = pl.BlockSpec((1, cp), lambda cc, t: (0, 0))
    aff_spec12 = pl.BlockSpec((2, cp), lambda cc, t: (0, 0))
    stats_spec = pl.BlockSpec((1, 2, cp), lambda cc, t: (cc, 0, 0))
    # TODO(synk): pipeline_mode=pl.Buffered(1) on w/vec/aff specs would save ~one weight copy
    # of VMEM per stage; left at default buffering for compile safety.

    conv_params = pltpu.CompilerParams(
        dimension_semantics=("parallel", "arbitrary"), vmem_limit_bytes=vmem_limit)
    par_params = pltpu.CompilerParams(
        dimension_semantics=("parallel",), vmem_limit_bytes=vmem_limit)

    act_shape = jax.ShapeDtypeStruct((n, length, cp), compute_dtype)
    stats_shape = jax.ShapeDtypeStruct((ncores, 2, cp), jnp.float32)
    aff_shape = jax.ShapeDtypeStruct((2, cp), jnp.float32)

    # stage 1: conv1 (+bias); per-core bn1 (sum, sumsq) partials
    y1, stats1 = pl.pallas_call(
        _conv1_kernel,
        grid=grid12,
        in_specs=[act_spec12, w_spec, vec_spec12],
        out_specs=(act_spec12, stats_spec),
        out_shape=(act_shape, stats_shape),
        compiler_params=conv_params,
    )(x_p, w1_p, b1_p)

    # tiny finalize: combine partials -> fused bn1 (scale, shift)
    aff1 = pl.pallas_call(
        functools.partial(_finalize_kernel, total_rows=total_rows),
        out_shape=aff_shape,
    )(stats1, g1_p, be1_p)

    # stage 2: bn1 + relu + conv2; per-core bn2 partials; y2 reuses y1's HBM buffer
    y2, stats2 = pl.pallas_call(
        _conv2_kernel,
        grid=grid12,
        in_specs=[act_spec12, w_spec, aff_spec12],
        out_specs=(act_spec12, stats_spec),
        out_shape=(act_shape, stats_shape),
        compiler_params=conv_params,
        input_output_aliases={0: 0},
    )(y1, w2_p, aff1)

    aff2 = pl.pallas_call(
        functools.partial(_finalize_kernel, total_rows=total_rows),
        out_shape=aff_shape,
    )(stats2, g2_p, be2_p)

    # stage 3: bn2 + residual + relu (pure epilogue, fully parallel); alias y2 when possible
    act_spec3 = pl.BlockSpec((block_n, length, cp), lambda i: (i, 0, 0))
    aff_spec3 = pl.BlockSpec((2, cp), lambda i: (0, 0))
    alias3 = {0: 0} if jnp.dtype(out_dtype) == jnp.dtype(compute_dtype) else {}
    out = pl.pallas_call(
        _bn_residual_kernel,
        grid=(num_tiles,),
        in_specs=[act_spec3, aff_spec3, act_spec3],
        out_specs=act_spec3,
        out_shape=jax.ShapeDtypeStruct((n, length, cp), out_dtype),
        compiler_params=par_params,
        input_output_aliases=alias3,
    )(y2, aff2, x_p)

    return jnp.transpose(out[:, :, :c], (0, 2, 1))   # back to (N, C, L)


# ----------------------------------- reference -------------------------------------------

def reference(x_ncl, params):
    """Pure-JAX f32 reference with identical math (training-mode BN, biased variance)."""
    w1, b1, g1, be1, w2, g2, be2 = params
    n, c, length = x_ncl.shape
    x = jnp.transpose(x_ncl, (0, 2, 1))  # (N, L, C)

    def conv(h, w, bias):
        hp = jnp.pad(h, ((0, 0), (1, 1), (0, 0)))
        wk = jnp.transpose(w, (2, 1, 0))  # (K, Cin, Cout)
        y = sum(jnp.einsum('nlc,cd->nld', hp[:, k:k + length, :], wk[k])
                for k in range(KSIZE))
        return y if bias is None else y + bias[None, None, :]

    def bn(y, g, b):
        m = jnp.mean(y, axis=(0, 1), keepdims=True)
        v = jnp.mean((y - m) ** 2, axis=(0, 1), keepdims=True)
        return (y - m) * jax.lax.rsqrt(v + EPS) * g + b

    y = jax.nn.relu(bn(conv(x, w1, b1), g1, be1))
    y = bn(conv(y, w2, None), g2, be2)
    return jnp.transpose(jax.nn.relu(y + x), (0, 2, 1))


if __name__ == "__main__":
    N, C, L = 2, 16, 16  # in_channel == out_channel so the residual add is valid

    key = jax.random.PRNGKey(0)
    k1, k2, k3, k4, k5, k6, k7, kx = jax.random.split(key, 8)

    # deterministic synthetic parameters (PyTorch shapes: conv weight (Cout, Cin, K))
    w1 = 0.1 * jax.random.normal(k1, (C, C, KSIZE), jnp.float32)
    b1 = 0.1 * jax.random.normal(k2, (C,), jnp.float32)
    w2 = 0.1 * jax.random.normal(k3, (C, C, KSIZE), jnp.float32)
    g1 = 1.0 + 0.1 * jax.random.normal(k4, (C,), jnp.float32)
    be1 = 0.1 * jax.random.normal(k5, (C,), jnp.float32)
    g2 = 1.0 + 0.1 * jax.random.normal(k6, (C,), jnp.float32)
    be2 = 0.1 * jax.random.normal(k7, (C,), jnp.float32)
    params = (w1, b1, g1, be1, w2, g2, be2)

    x = jax.random.normal(kx, (N, C, L), jnp.float32)

    ref = jax.block_until_ready(reference(x, params))

    # exactness check: f32 MXU path, block_n=1 so the grid has 2 tiles and the per-core
    # BN-statistic partials + finalize combine actually exercise multi-step accumulation.
    run_f32 = jax.jit(functools.partial(basic_block, compute_dtype=jnp.float32,
                                        out_dtype=jnp.float32, block_n=1))
    out_f32 = jax.block_until_ready(run_f32(x, params))
    assert out_f32.shape == (N, C, L)
    assert jnp.allclose(out_f32, ref, atol=1e-4, rtol=1e-4), "f32 path mismatch vs reference"

    # mixed precision: bf16 MXU inputs + bf16 epilogue store, automatic tile selection.
    run_bf16 = jax.jit(functools.partial(basic_block, compute_dtype=jnp.bfloat16))
    out_bf16 = jax.block_until_ready(run_bf16(x, params))
    assert out_bf16.shape == (N, C, L)
    assert jnp.allclose(out_bf16.astype(jnp.float32), ref, atol=1e-1, rtol=1e-1), \
        "bf16 path drifted too far"

    print("KERNEL_OK")
</pallas_src>

<mosaic_0001>
module attributes {stable_mosaic.version = 11 : i64} {
  func.func @_conv1_kernel(%arg0: i32, %arg1: i32, %arg2: memref<1x16x128xf32, #tpu.memory_space<vmem>>, %arg3: memref<3x128x128xf32, #tpu.memory_space<vmem>>, %arg4: memref<1x128xf32, #tpu.memory_space<vmem>>, %arg5: memref<1x16x128xf32, #tpu.memory_space<vmem>>, %arg6: memref<1x2x128xf32, #tpu.memory_space<vmem>>) attributes {dimension_semantics = [#tpu.dimension_semantics<parallel>, #tpu.dimension_semantics<arbitrary>], iteration_bounds = array<i64: 2, 1>, scalar_prefetch = 0 : i64, scratch_operands = 0 : i64, tpu.core_type = #tpu.core_type<tc>, window_params = [{transform_indices = @transform_0, window_bounds = array<i64: 1, 16, 128>}, {pipeline_mode = #tpu.pipeline_mode<synchronous>, transform_indices = @transform_1, window_bounds = array<i64: 3, 128, 128>}, {pipeline_mode = #tpu.pipeline_mode<synchronous>, transform_indices = @transform_2, window_bounds = array<i64: 1, 128>}, {transform_indices = @transform_3, window_bounds = array<i64: 1, 16, 128>}, {transform_indices = @transform_4, window_bounds = array<i64: 1, 2, 128>}]} {
    %c0 = arith.constant 0 : index
    %c0_0 = arith.constant 0 : index
    %c0_1 = arith.constant 0 : index
    %0 = vector.load %arg2[%c0, %c0_0, %c0_1] : memref<1x16x128xf32, #tpu.memory_space<vmem>>, vector<1x16x128xf32>
    %cst = arith.constant 0.000000e+00 : f32
    %1 = vector.broadcast %cst : f32 to vector<1x1x128xf32>
    %2 = vector.extract_strided_slice %0 {offsets = [0, 0, 0], sizes = [1, 15, 128], strides = [1, 1, 1]} : vector<1x16x128xf32> to vector<1x15x128xf32>
    %3 = tpu.concatenate %1, %2 in 1 : vector<1x1x128xf32>, vector<1x15x128xf32> -> vector<1x16x128xf32>
    %4 = vector.shape_cast %3 : vector<1x16x128xf32> to vector<16x128xf32>
    %5 = vector.extract_strided_slice %0 {offsets = [0, 1, 0], sizes = [1, 15, 128], strides = [1, 1, 1]} : vector<1x16x128xf32> to vector<1x15x128xf32>
    %6 = tpu.concatenate %5, %1 in 1 : vector<1x15x128xf32>, vector<1x1x128xf32> -> vector<1x16x128xf32>
    %7 = vector.shape_cast %6 : vector<1x16x128xf32> to vector<16x128xf32>
    %8 = vector.shape_cast %0 : vector<1x16x128xf32> to vector<16x128xf32>
    %c0_2 = arith.constant 0 : index
    %c0_3 = arith.constant 0 : index
    %c0_4 = arith.constant 0 : index
    %9 = vector.load %arg3[%c0_2, %c0_3, %c0_4] : memref<3x128x128xf32, #tpu.memory_space<vmem>>, vector<1x128x128xf32>
    %10 = vector.shape_cast %9 : vector<1x128x128xf32> to vector<128x128xf32>
    %cst_5 = arith.constant dense<0.000000e+00> : vector<16x128xf32>
    %11 = tpu.matmul %4, %10, %cst_5 {dimension_numbers = #tpu.dot_dimension_numbers<[1], [0], [0], [1], [0, 0, 1, 1], [], []>} : vector<16x128xf32>, vector<128x128xf32>, vector<16x128xf32> -> vector<16x128xf32>
    %c1 = arith.constant 1 : index
    %c0_6 = arith.constant 0 : index
    %c0_7 = arith.constant 0 : index
    %12 = vector.load %arg3[%c1, %c0_6, %c0_7] : memref<3x128x128xf32, #tpu.memory_space<vmem>>, vector<1x128x128xf32>
    %13 = vector.shape_cast %12 : vector<1x128x128xf32> to vector<128x128xf32>
    %cst_8 = arith.constant dense<0.000000e+00> : vector<16x128xf32>
    %14 = tpu.matmul %8, %13, %cst_8 {dimension_numbers = #tpu.dot_dimension_numbers<[1], [0], [0], [1], [0, 0, 1, 1], [], []>} : vector<16x128xf32>, vector<128x128xf32>, vector<16x128xf32> -> vector<16x128xf32>
    %15 = arith.addf %11, %14 : vector<16x128xf32>
    %c2 = arith.constant 2 : index
    %c0_9 = arith.constant 0 : index
    %c0_10 = arith.constant 0 : index
    %16 = vector.load %arg3[%c2, %c0_9, %c0_10] : memref<3x128x128xf32, #tpu.memory_space<vmem>>, vector<1x128x128xf32>
    %17 = vector.shape_cast %16 : vector<1x128x128xf32> to vector<128x128xf32>
    %cst_11 = arith.constant dense<0.000000e+00> : vector<16x128xf32>
    %18 = tpu.matmul %7, %17, %cst_11 {dimension_numbers = #tpu.dot_dimension_numbers<[1], [0], [0], [1], [0, 0, 1, 1], [], []>} : vector<16x128xf32>, vector<128x128xf32>, vector<16x128xf32> -> vector<16x128xf32>
    %19 = arith.addf %15, %18 : vector<16x128xf32>
    %c0_12 = arith.constant 0 : index
    %c0_13 = arith.constant 0 : index
    %20 = vector.load %arg4[%c0_12, %c0_13] : memref<1x128xf32, #tpu.memory_space<vmem>>, vector<1x128xf32>
    %21 = vector.broadcast %20 : vector<1x128xf32> to vector<16x128xf32>
    %22 = arith.addf %19, %21 : vector<16x128xf32>
    %23 = vector.shape_cast %22 : vector<16x128xf32> to vector<1x16x128xf32>
    %c0_14 = arith.constant 0 : index
    %c0_15 = arith.constant 0 : index
    %c0_16 = arith.constant 0 : index
    %24 = vector.load %arg5[%c0_14, %c0_15, %c0_16] : memref<1x16x128xf32, #tpu.memory_space<vmem>>, vector<1x16x128xf32>
    tpu.vector_store %arg5[%c0_14, %c0_15, %c0_16], %23 {strides = array<i32>} : memref<1x16x128xf32, #tpu.memory_space<vmem>>, vector<1x16x128xf32>,
    %c0_i32 = arith.constant 0 : i32
    %25 = arith.cmpi eq, %arg1, %c0_i32 : i32
    %26 = arith.extui %25 : i1 to i32
    %c0_i32_17 = arith.constant 0 : i32
    %27 = arith.cmpi ne, %26, %c0_i32_17 : i32
    scf.if %27 {
      %cst_32 = arith.constant 0.000000e+00 : f32
      %45 = vector.broadcast %cst_32 : f32 to vector<1x2x128xf32>
      %c0_33 = arith.constant 0 : index
      %c0_34 = arith.constant 0 : index
      %c0_35 = arith.constant 0 : index
      %46 = vector.load %arg6[%c0_33, %c0_34, %c0_35] : memref<1x2x128xf32, #tpu.memory_space<vmem>>, vector<1x2x128xf32>
      tpu.vector_store %arg6[%c0_33, %c0_34, %c0_35], %45 {strides = array<i32>} : memref<1x2x128xf32, #tpu.memory_space<vmem>>, vector<1x2x128xf32>,
    } else {
    }
    %c0_18 = arith.constant 0 : index
    %c0_19 = arith.constant 0 : index
    %c0_20 = arith.constant 0 : index
    %28 = vector.load %arg6[%c0_18, %c0_19, %c0_20] : memref<1x2x128xf32, #tpu.memory_space<vmem>>, vector<1x1x128xf32>
    %29 = vector.shape_cast %28 : vector<1x1x128xf32> to vector<1x128xf32>
    %cst_21 = arith.constant dense<0.000000e+00> : vector<128xf32>
    %30 = vector.multi_reduction <add>, %22, %cst_21 [0] : vector<16x128xf32> to vector<128xf32>
    %31 = vector.shape_cast %30 : vector<128xf32> to vector<1x128xf32>
    %32 = arith.addf %29, %31 : vector<1x128xf32>
    %c0_22 = arith.constant 0 : index
    %c0_23 = arith.constant 0 : index
    %c0_24 = arith.constant 0 : index
    %33 = vector.load %arg6[%c0_22, %c0_23, %c0_24] : memref<1x2x128xf32, #tpu.memory_space<vmem>>, vector<1x1x128xf32>
    %34 = vector.shape_cast %33 : vector<1x1x128xf32> to vector<1x128xf32>
    %35 = vector.shape_cast %32 : vector<1x128xf32> to vector<1x1x128xf32>
    tpu.vector_store %arg6[%c0_22, %c0_23, %c0_24], %35 {strides = array<i32>} : memref<1x2x128xf32, #tpu.memory_space<vmem>>, vector<1x1x128xf32>,
    %c0_25 = arith.constant 0 : index
    %c1_26 = arith.constant 1 : index
    %c0_27 = arith.constant 0 : index
    %36 = vector.load %arg6[%c0_25, %c1_26, %c0_27] : memref<1x2x128xf32, #tpu.memory_space<vmem>>, vector<1x1x128xf32>
    %37 = vector.shape_cast %36 : vector<1x1x128xf32> to vector<1x128xf32>
    %38 = arith.mulf %22, %22 : vector<16x128xf32>
    %cst_28 = arith.constant dense<0.000000e+00> : vector<128xf32>
    %39 = vector.multi_reduction <add>, %38, %cst_28 [0] : vector<16x128xf32> to vector<128xf32>
    %40 = vector.shape_cast %39 : vector<128xf32> to vector<1x128xf32>
    %41 = arith.addf %37, %40 : vector<1x128xf32>
    %c0_29 = arith.constant 0 : index
    %c1_30 = arith.constant 1 : index
    %c0_31 = arith.constant 0 : index
    %42 = vector.load %arg6[%c0_29, %c1_30, %c0_31] : memref<1x2x128xf32, #tpu.memory_space<vmem>>, vector<1x1x128xf32>
    %43 = vector.shape_cast %42 : vector<1x1x128xf32> to vector<1x128xf32>
    %44 = vector.shape_cast %41 : vector<1x128xf32> to vector<1x1x128xf32>
    tpu.vector_store %arg6[%c0_29, %c1_30, %c0_31], %44 {strides = array<i32>} : memref<1x2x128xf32, #tpu.memory_space<vmem>>, vector<1x1x128xf32>,
    return
  }
  func.func @transform_0(%arg0: i32, %arg1: i32) -> (i32, i32, i32) {
    %c1_i32 = arith.constant 1 : i32
    %0 = arith.muli %arg0, %c1_i32 : i32
    %1 = arith.addi %0, %arg1 : i32
    %c0_i32 = arith.constant 0 : i32
    %c0_i32_0 = arith.constant 0 : i32
    %c0_i32_1 = arith.constant 0 : i32
    return %1, %c0_i32, %c0_i32_0 : i32, i32, i32
  }
  func.func @transform_1(%arg0: i32, %arg1: i32) -> (i32, i32, i32) {
    %c0_i32 = arith.constant 0 : i32
    %c0_i32_0 = arith.constant 0 : i32
    %c0_i32_1 = arith.constant 0 : i32
    %c0_i32_2 = arith.constant 0 : i32
    return %c0_i32, %c0_i32_0, %c0_i32_1 : i32, i32, i32
  }
  func.func @transform_2(%arg0: i32, %arg1: i32) -> (i32, i32) {
    %c0_i32 = arith.constant 0 : i32
    %c0_i32_0 = arith.constant 0 : i32
    %c0_i32_1 = arith.constant 0 : i32
    return %c0_i32, %c0_i32_0 : i32, i32
  }
  func.func @transform_3(%arg0: i32, %arg1: i32) -> (i32, i32, i32) {
    %c1_i32 = arith.constant 1 : i32
    %0 = arith.muli %arg0, %c1_i32 : i32
    %1 = arith.addi %0, %arg1 : i32
    %c0_i32 = arith.constant 0 : i32
    %c0_i32_0 = arith.constant 0 : i32
    %c0_i32_1 = arith.constant 0 : i32
    return %1, %c0_i32, %c0_i32_0 : i32, i32, i32
  }
  func.func @transform_4(%arg0: i32, %arg1: i32) -> (i32, i32, i32) {
    %c0_i32 = arith.constant 0 : i32
    %c0_i32_0 = arith.constant 0 : i32
    %c0_i32_1 = arith.constant 0 : i32
    return %arg0, %c0_i32, %c0_i32_0 : i32, i32, i32
  }
}

module attributes {stable_mosaic.version = 11 : i64} {
  func.func @_finalize_kernel(%arg0: memref<2x2x128xf32, #tpu.memory_space<vmem>>, %arg1: memref<1x128xf32, #tpu.memory_space<vmem>>, %arg2: memref<1x128xf32, #tpu.memory_space<vmem>>, %arg3: memref<2x128xf32, #tpu.memory_space<vmem>>) attributes {dimension_semantics = [], scalar_prefetch = 0 : i64, scratch_operands = 0 : i64, tpu.core_type = #tpu.core_type<tc>} {
    %c0 = arith.constant 0 : index
    %c0_0 = arith.constant 0 : index
    %c0_1 = arith.constant 0 : index
    %0 = vector.load %arg0[%c0, %c0_0, %c0_1] : memref<2x2x128xf32, #tpu.memory_space<vmem>>, vector<2x2x128xf32>
    %cst = arith.constant dense<0.000000e+00> : vector<2x128xf32>
    %1 = vector.multi_reduction <add>, %0, %cst [0] : vector<2x2x128xf32> to vector<2x128xf32>
    %2 = vector.extract_strided_slice %1 {offsets = [0, 0], sizes = [1, 128], strides = [1, 1]} : vector<2x128xf32> to vector<1x128xf32>
    %cst_2 = arith.constant 3.200000e+01 : f32
    %3 = vector.broadcast %cst_2 : f32 to vector<1x128xf32>
    %4 = arith.divf %2, %3 : vector<1x128xf32>
    %5 = vector.extract_strided_slice %1 {offsets = [1, 0], sizes = [1, 128], strides = [1, 1]} : vector<2x128xf32> to vector<1x128xf32>
    %cst_3 = arith.constant 3.200000e+01 : f32
    %6 = vector.broadcast %cst_3 : f32 to vector<1x128xf32>
    %7 = arith.divf %5, %6 : vector<1x128xf32>
    %8 = arith.mulf %4, %4 : vector<1x128xf32>
    %9 = arith.subf %7, %8 : vector<1x128xf32>
    %cst_4 = arith.constant 0.000000e+00 : f32
    %10 = vector.broadcast %cst_4 : f32 to vector<1x128xf32>
    %11 = arith.maximumf %9, %10 : vector<1x128xf32>
    %c0_5 = arith.constant 0 : index
    %c0_6 = arith.constant 0 : index
    %12 = vector.load %arg1[%c0_5, %c0_6] : memref<1x128xf32, #tpu.memory_space<vmem>>, vector<1x128xf32>
    %cst_7 = arith.constant 9.99999974E-6 : f32
    %13 = vector.broadcast %cst_7 : f32 to vector<1x128xf32>
    %14 = arith.addf %11, %13 : vector<1x128xf32>
    %15 = math.rsqrt %14 : vector<1x128xf32>
    %16 = arith.mulf %12, %15 : vector<1x128xf32>
    %c0_8 = arith.constant 0 : index
    %c0_9 = arith.constant 0 : index
    %17 = vector.load %arg3[%c0_8, %c0_9] : memref<2x128xf32, #tpu.memory_space<vmem>>, vector<1x128xf32>
    tpu.vector_store %arg3[%c0_8, %c0_9], %16 {strides = array<i32>} : memref<2x128xf32, #tpu.memory_space<vmem>>, vector<1x128xf32>,
    %c0_10 = arith.constant 0 : index
    %c0_11 = arith.constant 0 : index
    %18 = vector.load %arg2[%c0_10, %c0_11] : memref<1x128xf32, #tpu.memory_space<vmem>>, vector<1x128xf32>
    %19 = arith.mulf %4, %16 : vector<1x128xf32>
    %20 = arith.subf %18, %19 : vector<1x128xf32>
    %c1 = arith.constant 1 : index
    %c0_12 = arith.constant 0 : index
    %21 = vector.load %arg3[%c1, %c0_12] : memref<2x128xf32, #tpu.memory_space<vmem>>, vector<1x128xf32>
    tpu.vector_store %arg3[%c1, %c0_12], %20 {strides = array<i32>} : memref<2x128xf32, #tpu.memory_space<vmem>>, vector<1x128xf32>,
    return
  }
}

module attributes {stable_mosaic.version = 11 : i64} {
  func.func @_bn_residual_kernel(%arg0: i32, %arg1: memref<1x16x128xf32, #tpu.memory_space<vmem>>, %arg2: memref<2x128xf32, #tpu.memory_space<vmem>>, %arg3: memref<1x16x128xf32, #tpu.memory_space<vmem>>, %arg4: memref<1x16x128xf32, #tpu.memory_space<vmem>>) attributes {dimension_semantics = [#tpu.dimension_semantics<parallel>], iteration_bounds = array<i64: 2>, scalar_prefetch = 0 : i64, scratch_operands = 0 : i64, tpu.core_type = #tpu.core_type<tc>, window_params = [{transform_indices = @transform_0, window_bounds = array<i64: 1, 16, 128>}, {pipeline_mode = #tpu.pipeline_mode<synchronous>, transform_indices = @transform_1, window_bounds = array<i64: 2, 128>}, {transform_indices = @transform_2, window_bounds = array<i64: 1, 16, 128>}, {transform_indices = @transform_3, window_bounds = array<i64: 1, 16, 128>}]} {
    %c0 = arith.constant 0 : index
    %c0_0 = arith.constant 0 : index
    %c0_1 = arith.constant 0 : index
    %0 = vector.load %arg1[%c0, %c0_0, %c0_1] : memref<1x16x128xf32, #tpu.memory_space<vmem>>, vector<1x16x128xf32>
    %1 = vector.shape_cast %0 : vector<1x16x128xf32> to vector<16x128xf32>
    %c0_2 = arith.constant 0 : index
    %c0_3 = arith.constant 0 : index
    %c0_4 = arith.constant 0 : index
    %2 = vector.load %arg3[%c0_2, %c0_3, %c0_4] : memref<1x16x128xf32, #tpu.memory_space<vmem>>, vector<1x16x128xf32>
    %3 = vector.shape_cast %2 : vector<1x16x128xf32> to vector<16x128xf32>
    %c0_5 = arith.constant 0 : index
    %c0_6 = arith.constant 0 : index
    %4 = vector.load %arg2[%c0_5, %c0_6] : memref<2x128xf32, #tpu.memory_space<vmem>>, vector<1x128xf32>
    %5 = vector.broadcast %4 : vector<1x128xf32> to vector<16x128xf32>
    %6 = arith.mulf %1, %5 : vector<16x128xf32>
    %c1 = arith.constant 1 : index
    %c0_7 = arith.constant 0 : index
    %7 = vector.load %arg2[%c1, %c0_7] : memref<2x128xf32, #tpu.memory_space<vmem>>, vector<1x128xf32>
    %8 = vector.broadcast %7 : vector<1x128xf32> to vector<16x128xf32>
    %9 = arith.addf %6, %8 : vector<16x128xf32>
    %10 = arith.addf %9, %3 : vector<16x128xf32>
    %cst = arith.constant 0.000000e+00 : f32
    %11 = vector.broadcast %cst : f32 to vector<16x128xf32>
    %12 = arith.maximumf %10, %11 : vector<16x128xf32>
    %13 = vector.shape_cast %12 : vector<16x128xf32> to vector<1x16x128xf32>
    %c0_8 = arith.constant 0 : index
    %c0_9 = arith.constant 0 : index
    %c0_10 = arith.constant 0 : index
    %14 = vector.load %arg4[%c0_8, %c0_9, %c0_10] : memref<1x16x128xf32, #tpu.memory_space<vmem>>, vector<1x16x128xf32>
    tpu.vector_store %arg4[%c0_8, %c0_9, %c0_10], %13 {strides = array<i32>} : memref<1x16x128xf32, #tpu.memory_space<vmem>>, vector<1x16x128xf32>,
    return
  }
  func.func @transform_0(%arg0: i32) -> (i32, i32, i32) {
    %c0_i32 = arith.constant 0 : i32
    %c0_i32_0 = arith.constant 0 : i32
    %c0_i32_1 = arith.constant 0 : i32
    return %arg0, %c0_i32, %c0_i32_0 : i32, i32, i32
  }
  func.func @transform_1(%arg0: i32) -> (i32, i32) {
    %c0_i32 = arith.constant 0 : i32
    %c0_i32_0 = arith.constant 0 : i32
    %c0_i32_1 = arith.constant 0 : i32
    return %c0_i32, %c0_i32_0 : i32, i32
  }
  func.func @transform_2(%arg0: i32) -> (i32, i32, i32) {
    %c0_i32 = arith.constant 0 : i32
    %c0_i32_0 = arith.constant 0 : i32
    %c0_i32_1 = arith.constant 0 : i32
    return %arg0, %c0_i32, %c0_i32_0 : i32, i32, i32
  }
  func.func @transform_3(%arg0: i32) -> (i32, i32, i32) {
    %c0_i32 = arith.constant 0 : i32
    %c0_i32_0 = arith.constant 0 : i32
    %c0_i32_1 = arith.constant 0 : i32
    return %arg0, %c0_i32, %c0_i32_0 : i32, i32, i32
  }
}

module attributes {stable_mosaic.version = 11 : i64} {
  func.func @_conv2_kernel(%arg0: i32, %arg1: i32, %arg2: memref<1x16x128xf32, #tpu.memory_space<vmem>>, %arg3: memref<3x128x128xf32, #tpu.memory_space<vmem>>, %arg4: memref<2x128xf32, #tpu.memory_space<vmem>>, %arg5: memref<1x16x128xf32, #tpu.memory_space<vmem>>, %arg6: memref<1x2x128xf32, #tpu.memory_space<vmem>>) attributes {dimension_semantics = [#tpu.dimension_semantics<parallel>, #tpu.dimension_semantics<arbitrary>], iteration_bounds = array<i64: 2, 1>, scalar_prefetch = 0 : i64, scratch_operands = 0 : i64, tpu.core_type = #tpu.core_type<tc>, window_params = [{transform_indices = @transform_0, window_bounds = array<i64: 1, 16, 128>}, {pipeline_mode = #tpu.pipeline_mode<synchronous>, transform_indices = @transform_1, window_bounds = array<i64: 3, 128, 128>}, {pipeline_mode = #tpu.pipeline_mode<synchronous>, transform_indices = @transform_2, window_bounds = array<i64: 2, 128>}, {transform_indices = @transform_3, window_bounds = array<i64: 1, 16, 128>}, {transform_indices = @transform_4, window_bounds = array<i64: 1, 2, 128>}]} {
    %c0 = arith.constant 0 : index
    %c0_0 = arith.constant 0 : index
    %c0_1 = arith.constant 0 : index
    %0 = vector.load %arg2[%c0, %c0_0, %c0_1] : memref<1x16x128xf32, #tpu.memory_space<vmem>>, vector<1x16x128xf32>
    %1 = vector.shape_cast %0 : vector<1x16x128xf32> to vector<16x128xf32>
    %c0_2 = arith.constant 0 : index
    %c0_3 = arith.constant 0 : index
    %2 = vector.load %arg4[%c0_2, %c0_3] : memref<2x128xf32, #tpu.memory_space<vmem>>, vector<1x128xf32>
    %3 = vector.broadcast %2 : vector<1x128xf32> to vector<16x128xf32>
    %4 = arith.mulf %1, %3 : vector<16x128xf32>
    %c1 = arith.constant 1 : index
    %c0_4 = arith.constant 0 : index
    %5 = vector.load %arg4[%c1, %c0_4] : memref<2x128xf32, #tpu.memory_space<vmem>>, vector<1x128xf32>
    %6 = vector.broadcast %5 : vector<1x128xf32> to vector<16x128xf32>
    %7 = arith.addf %4, %6 : vector<16x128xf32>
    %cst = arith.constant 0.000000e+00 : f32
    %8 = vector.broadcast %cst : f32 to vector<16x128xf32>
    %9 = arith.maximumf %7, %8 : vector<16x128xf32>
    %10 = vector.shape_cast %9 : vector<16x128xf32> to vector<1x16x128xf32>
    %cst_5 = arith.constant 0.000000e+00 : f32
    %11 = vector.broadcast %cst_5 : f32 to vector<1x1x128xf32>
    %12 = vector.extract_strided_slice %10 {offsets = [0, 0, 0], sizes = [1, 15, 128], strides = [1, 1, 1]} : vector<1x16x128xf32> to vector<1x15x128xf32>
    %13 = tpu.concatenate %11, %12 in 1 : vector<1x1x128xf32>, vector<1x15x128xf32> -> vector<1x16x128xf32>
    %14 = vector.shape_cast %13 : vector<1x16x128xf32> to vector<16x128xf32>
    %15 = vector.extract_strided_slice %10 {offsets = [0, 1, 0], sizes = [1, 15, 128], strides = [1, 1, 1]} : vector<1x16x128xf32> to vector<1x15x128xf32>
    %16 = tpu.concatenate %15, %11 in 1 : vector<1x15x128xf32>, vector<1x1x128xf32> -> vector<1x16x128xf32>
    %17 = vector.shape_cast %16 : vector<1x16x128xf32> to vector<16x128xf32>
    %18 = vector.shape_cast %10 : vector<1x16x128xf32> to vector<16x128xf32>
    %c0_6 = arith.constant 0 : index
    %c0_7 = arith.constant 0 : index
    %c0_8 = arith.constant 0 : index
    %19 = vector.load %arg3[%c0_6, %c0_7, %c0_8] : memref<3x128x128xf32, #tpu.memory_space<vmem>>, vector<1x128x128xf32>
    %20 = vector.shape_cast %19 : vector<1x128x128xf32> to vector<128x128xf32>
    %cst_9 = arith.constant dense<0.000000e+00> : vector<16x128xf32>
    %21 = tpu.matmul %14, %20, %cst_9 {dimension_numbers = #tpu.dot_dimension_numbers<[1], [0], [0], [1], [0, 0, 1, 1], [], []>} : vector<16x128xf32>, vector<128x128xf32>, vector<16x128xf32> -> vector<16x128xf32>
    %c1_10 = arith.constant 1 : index
    %c0_11 = arith.constant 0 : index
    %c0_12 = arith.constant 0 : index
    %22 = vector.load %arg3[%c1_10, %c0_11, %c0_12] : memref<3x128x128xf32, #tpu.memory_space<vmem>>, vector<1x128x128xf32>
    %23 = vector.shape_cast %22 : vector<1x128x128xf32> to vector<128x128xf32>
    %cst_13 = arith.constant dense<0.000000e+00> : vector<16x128xf32>
    %24 = tpu.matmul %18, %23, %cst_13 {dimension_numbers = #tpu.dot_dimension_numbers<[1], [0], [0], [1], [0, 0, 1, 1], [], []>} : vector<16x128xf32>, vector<128x128xf32>, vector<16x128xf32> -> vector<16x128xf32>
    %25 = arith.addf %21, %24 : vector<16x128xf32>
    %c2 = arith.constant 2 : index
    %c0_14 = arith.constant 0 : index
    %c0_15 = arith.constant 0 : index
    %26 = vector.load %arg3[%c2, %c0_14, %c0_15] : memref<3x128x128xf32, #tpu.memory_space<vmem>>, vector<1x128x128xf32>
    %27 = vector.shape_cast %26 : vector<1x128x128xf32> to vector<128x128xf32>
    %cst_16 = arith.constant dense<0.000000e+00> : vector<16x128xf32>
    %28 = tpu.matmul %17, %27, %cst_16 {dimension_numbers = #tpu.dot_dimension_numbers<[1], [0], [0], [1], [0, 0, 1, 1], [], []>} : vector<16x128xf32>, vector<128x128xf32>, vector<16x128xf32> -> vector<16x128xf32>
    %29 = arith.addf %25, %28 : vector<16x128xf32>
    %30 = vector.shape_cast %29 : vector<16x128xf32> to vector<1x16x128xf32>
    %c0_17 = arith.constant 0 : index
    %c0_18 = arith.constant 0 : index
    %c0_19 = arith.constant 0 : index
    %31 = vector.load %arg5[%c0_17, %c0_18, %c0_19] : memref<1x16x128xf32, #tpu.memory_space<vmem>>, vector<1x16x128xf32>
    tpu.vector_store %arg5[%c0_17, %c0_18, %c0_19], %30 {strides = array<i32>} : memref<1x16x128xf32, #tpu.memory_space<vmem>>, vector<1x16x128xf32>,
    %c0_i32 = arith.constant 0 : i32
    %32 = arith.cmpi eq, %arg1, %c0_i32 : i32
    %33 = arith.extui %32 : i1 to i32
    %c0_i32_20 = arith.constant 0 : i32
    %34 = arith.cmpi ne, %33, %c0_i32_20 : i32
    scf.if %34 {
      %cst_35 = arith.constant 0.000000e+00 : f32
      %52 = vector.broadcast %cst_35 : f32 to vector<1x2x128xf32>
      %c0_36 = arith.constant 0 : index
      %c0_37 = arith.constant 0 : index
      %c0_38 = arith.constant 0 : index
      %53 = vector.load %arg6[%c0_36, %c0_37, %c0_38] : memref<1x2x128xf32, #tpu.memory_space<vmem>>, vector<1x2x128xf32>
      tpu.vector_store %arg6[%c0_36, %c0_37, %c0_38], %52 {strides = array<i32>} : memref<1x2x128xf32, #tpu.memory_space<vmem>>, vector<1x2x128xf32>,
    } else {
    }
    %c0_21 = arith.constant 0 : index
    %c0_22 = arith.constant 0 : index
    %c0_23 = arith.constant 0 : index
    %35 = vector.load %arg6[%c0_21, %c0_22, %c0_23] : memref<1x2x128xf32, #tpu.memory_space<vmem>>, vector<1x1x128xf32>
    %36 = vector.shape_cast %35 : vector<1x1x128xf32> to vector<1x128xf32>
    %cst_24 = arith.constant dense<0.000000e+00> : vector<128xf32>
    %37 = vector.multi_reduction <add>, %29, %cst_24 [0] : vector<16x128xf32> to vector<128xf32>
    %38 = vector.shape_cast %37 : vector<128xf32> to vector<1x128xf32>
    %39 = arith.addf %36, %38 : vector<1x128xf32>
    %c0_25 = arith.constant 0 : index
    %c0_26 = arith.constant 0 : index
    %c0_27 = arith.constant 0 : index
    %40 = vector.load %arg6[%c0_25, %c0_26, %c0_27] : memref<1x2x128xf32, #tpu.memory_space<vmem>>, vector<1x1x128xf32>
    %41 = vector.shape_cast %40 : vector<1x1x128xf32> to vector<1x128xf32>
    %42 = vector.shape_cast %39 : vector<1x128xf32> to vector<1x1x128xf32>
    tpu.vector_store %arg6[%c0_25, %c0_26, %c0_27], %42 {strides = array<i32>} : memref<1x2x128xf32, #tpu.memory_space<vmem>>, vector<1x1x128xf32>,
    %c0_28 = arith.constant 0 : index
    %c1_29 = arith.constant 1 : index
    %c0_30 = arith.constant 0 : index
    %43 = vector.load %arg6[%c0_28, %c1_29, %c0_30] : memref<1x2x128xf32, #tpu.memory_space<vmem>>, vector<1x1x128xf32>
    %44 = vector.shape_cast %43 : vector<1x1x128xf32> to vector<1x128xf32>
    %45 = arith.mulf %29, %29 : vector<16x128xf32>
    %cst_31 = arith.constant dense<0.000000e+00> : vector<128xf32>
    %46 = vector.multi_reduction <add>, %45, %cst_31 [0] : vector<16x128xf32> to vector<128xf32>
    %47 = vector.shape_cast %46 : vector<128xf32> to vector<1x128xf32>
    %48 = arith.addf %44, %47 : vector<1x128xf32>
    %c0_32 = arith.constant 0 : index
    %c1_33 = arith.constant 1 : index
    %c0_34 = arith.constant 0 : index
    %49 = vector.load %arg6[%c0_32, %c1_33, %c0_34] : memref<1x2x128xf32, #tpu.memory_space<vmem>>, vector<1x1x128xf32>
    %50 = vector.shape_cast %49 : vector<1x1x128xf32> to vector<1x128xf32>
    %51 = vector.shape_cast %48 : vector<1x128xf32> to vector<1x1x128xf32>
    tpu.vector_store %arg6[%c0_32, %c1_33, %c0_34], %51 {strides = array<i32>} : memref<1x2x128xf32, #tpu.memory_space<vmem>>, vector<1x1x128xf32>,
    return
  }
  func.func @transform_0(%arg0: i32, %arg1: i32) -> (i32, i32, i32) {
    %c1_i32 = arith.constant 1 : i32
    %0 = arith.muli %arg0, %c1_i32 : i32
    %1 = arith.addi %0, %arg1 : i32
    %c0_i32 = arith.constant 0 : i32
    %c0_i32_0 = arith.constant 0 : i32
    %c0_i32_1 = arith.constant 0 : i32
    return %1, %c0_i32, %c0_i32_0 : i32, i32, i32
  }
  func.func @transform_1(%arg0: i32, %arg1: i32) -> (i32, i32, i32) {
    %c0_i32 = arith.constant 0 : i32
    %c0_i32_0 = arith.constant 0 : i32
    %c0_i32_1 = arith.constant 0 : i32
    %c0_i32_2 = arith.constant 0 : i32
    return %c0_i32, %c0_i32_0, %c0_i32_1 : i32, i32, i32
  }
  func.func @transform_2(%arg0: i32, %arg1: i32) -> (i32, i32) {
    %c0_i32 = arith.constant 0 : i32
    %c0_i32_0 = arith.constant 0 : i32
    %c0_i32_1 = arith.constant 0 : i32
    return %c0_i32, %c0_i32_0 : i32, i32
  }
  func.func @transform_3(%arg0: i32, %arg1: i32) -> (i32, i32, i32) {
    %c1_i32 = arith.constant 1 : i32
    %0 = arith.muli %arg0, %c1_i32 : i32
    %1 = arith.addi %0, %arg1 : i32
    %c0_i32 = arith.constant 0 : i32
    %c0_i32_0 = arith.constant 0 : i32
    %c0_i32_1 = arith.constant 0 : i32
    return %1, %c0_i32, %c0_i32_0 : i32, i32, i32
  }
  func.func @transform_4(%arg0: i32, %arg1: i32) -> (i32, i32, i32) {
    %c0_i32 = arith.constant 0 : i32
    %c0_i32_0 = arith.constant 0 : i32
    %c0_i32_1 = arith.constant 0 : i32
    return %arg0, %c0_i32, %c0_i32_0 : i32, i32, i32
  }
}

</mosaic_0001>

<llo_original>
// kernel: basic_block.6
$region0: #{basic_block.6}
  #allocation0 [shape = 'u32[]', space=smem, size = 0x4, offset = 0x4, fixed_abs, tag = 'smem constant byte address 0x4 - core index']
  #allocation1 [shape = 'u32[144,128]{1,0:T(1,128)}', space=vmem, size = 0x12000, scoped, tag = 'internal scratch']
  %s0 = inlined_call_operand.vmem [shape: f32[2,2,128], index: 0, kind: input, shape index: {}]
  %s1 = inlined_call_operand.vmem [shape: f32[1,128], index: 1, kind: input, shape index: {}]
  %s2 = inlined_call_operand.vmem [shape: f32[1,128], index: 2, kind: input, shape index: {}]
  %s3 = inlined_call_operand.vmem [shape: f32[2,128], index: 3, kind: output, shape index: {}]
  %s4 = sld [smem:[#allocation0]]
  $region22: #{basic_block.6} parent=0
    _
  %s6 = ssub.s32 1, %s4
  %s7 = scalar_select 0, %s6, %s4
  // Predicated region
  $region2: #{basic_block.6} parent=0 // pred_check
    _
  $region3: #{basic_block.6} parent=0 // pred_check_branch
    %9 = sbr.rel (0) target = $region5
  $region4: #{basic_block.6} parent=0 // pred_region
    _
  $region5: #{basic_block.6} parent=0 // pred_fallthru
    _
  // Predicated region
  $region6: #{basic_block.6} parent=0 // pred_check
    _
  $region7: #{basic_block.6} parent=0 // pred_check_branch
    %11 = sbr.rel (0) target = $region9
  $region8: #{basic_block.6} parent=0 // pred_region
    _
  $region9: #{basic_block.6} parent=0 // pred_fallthru
    _
  // Predicated region
  $region10: #{basic_block.6} parent=0 // pred_check
    _
  $region11: #{basic_block.6} parent=0 // pred_check_branch
    %13 = sbr.rel (0) target = $region13
  $region12: #{basic_block.6} parent=0 // pred_region
    _
  $region13: #{basic_block.6} parent=0 // pred_fallthru
    _
  %v14 = vld [vmem:[%s0] sm:$0x3]
  %v15 = vld [vmem:[%s0 + $0x2] sm:$0x3]
  %vm16 = vcmask 1041408
  %v17 = vsel %vm16, %v14, 0.0
  %v18 = vsel %vm16, %v15, 0.0
  %v19 = vadd.f32 %v17, %v18
  %v20 = vrcp.pop 32.0
  %v21 = vmul.f32 %v19, %v20
  %v22 = vmul.f32 %v21, %v21
  %v24 = vrot.slane %v22, 7
  %v26 = vsub.f32 %v21, %v24
  %v27 = vmax.f32 %v26, 0.0
  %v28 = vld [vmem:[%s1] sm:$0x1]
  %v29 = vadd.f32 %v27, 1e-05
  %v30 = vrsqrt.pop %v29
  %v33 = vunpack.c.l.s4 1966171168
  %v34 = vunpack.c.0.s8 %v33
  %v35 = vlaneseq
  %v36 = vshrl.u32 %v35, 7
  %v37 = vsub.s32 %v34, %v36
  %v38 = vrot.slane %v30, %v37
  %v39 = vcombine.high %v38, %v38
  %v41 = vunpack.c.l.s4 1966171168
  %v42 = vunpack.c.0.s8 %v41
  %v43 = vlaneseq
  %v44 = vshrl.u32 %v43, 7
  %v45 = vsub.s32 %v42, %v44
  %v46 = vrot.slane %v39, %v45
  %v48 = vmul.f32 %v28, %v46
  %49 = vst [vmem:[%s3] sm:$0x1] %v48
  %v50 = vld [vmem:[%s2] sm:$0x1]
  %v51 = vmul.f32 %v21, %v48
  %v52 = vsub.f32 %v50, %v51
  %53 = vst [vmem:[%s3 + $0x1] sm:$0x1] %v52
  // Predicated region
  $region14: #{basic_block.6} parent=0 // pred_check
    _
  $region15: #{basic_block.6} parent=0 // pred_check_branch
    %55 = sbr.rel (0) target = $region17
  $region16: #{basic_block.6} parent=0 // pred_region
    _
  $region17: #{basic_block.6} parent=0 // pred_fallthru
    _
  // Predicated region
  $region18: #{basic_block.6} parent=0 // pred_check
    _
  $region19: #{basic_block.6} parent=0 // pred_check_branch
    %57 = sbr.rel (0) target = $region21
  $region20: #{basic_block.6} parent=0 // pred_region
    _
  $region21: #{basic_block.6} parent=0 // pred_fallthru
    _

// kernel: basic_block.9
$region0: #{basic_block.9}
  #allocation0 [shape = 'u32[]', space=smem, size = 0x4, offset = 0x4, fixed_abs, tag = 'smem constant byte address 0x4 - core index']
  #allocation1 [shape = 'u32[144,128]{1,0:T(1,128)}', space=vmem, size = 0x12000, scoped, tag = 'internal scratch']
  %s0 = inlined_call_operand.vmem [shape: f32[2,16,128], index: 0, kind: input, shape index: {}, may-alias: {0,3}]
  %s1 = inlined_call_operand.vmem [shape: f32[2,128], index: 1, kind: input, shape index: {}]
  %s2 = inlined_call_operand.vmem [shape: f32[2,16,128], index: 2, kind: input, shape index: {}]
  %s3 = inlined_call_operand.vmem [shape: f32[2,16,128], index: 3, kind: output, shape index: {}, may-alias: {0,3}]
  %s4 = sld [smem:[#allocation0]]
  $region45: #{basic_block.9} parent=0
    _
  %s6 = ssub.s32 1, %s4
  %s7 = scalar_select 0, %s6, %s4
  loop: start=0, step=1, limit=4
  $region2: #{basic_block.9} parent=0 // loop_pre_header
    _
  $region3: #{basic_block.9} parent=0 // loop_header
    %s9 = sphi 0, %s13
    %p10 = scmp.ge.s32.totalorder %s9, 4
    %s19 = sphi 0, %s21
    %s22 = sphi 0, %s19
    %s23 = sphi 0, %s22
    %s39 = sphi 0, %s23
    %s43 = sphi 0, %s43
    %s45 = sphi 0, %s43
    %s46 = sphi 0, %s45
    %s60 = sphi 0, %s46
    %s66 = sphi 0, %s68
    %s69 = sphi 0, %s66
    %s70 = sphi 0, %s69
    %s86 = sphi 0, %s70
    %s92 = sphi 0, %s94
    %s95 = sphi 0, %s92
    %s96 = sphi 0, %s95
    %s112 = sphi 0, %s96
  $region4: #{basic_block.9} parent=0 // loop_header_branch
    %12 = sbr.rel (%p10) target = $region8
  $region5: #{basic_block.9} parent=0 // loop_body
    %s14 = ssub.s32 %s9, 1
    %s15 = ssub.s32 %s9, 2
    %s16 = sadd.s32 %s9, 1
    %s17 = ssub.s32 %s9, %s16
    %p18 = scmp.eq.s32.totalorder %s17, 0
    %s20 = sadd.s32 %s19, 1
    %s21 = scalar_select %p18, %s19, %s20
    %p24 = pneg %p18
    %p25 = scmp.eq.s32.totalorder %s9, 1
    %p26 = por %p24, %p25
    %p27 = scmp.ne.s32.totalorder %s19, %s22
    %p28 = scmp.eq.s32.totalorder %s9, 0
    %p29 = por %p27, %p28
    %p30 = scmp.ne.s32.totalorder %s19, %s22
    %p31 = scmp.eq.s32.totalorder %s14, 1
    %p32 = por %p30, %p31
    %p33 = scmp.ne.s32.totalorder %s22, %s23
    %p34 = scmp.eq.s32.totalorder %s14, 0
    %p35 = por %p33, %p34
    %p36 = scmp.ne.s32.totalorder %s22, %s23
    %p37 = scmp.eq.s32.totalorder %s15, 1
    %p38 = por %p36, %p37
    %p40 = scmp.ne.s32.totalorder %s23, %s39
    %p41 = scmp.eq.s32.totalorder %s15, 0
    %p42 = por %p40, %p41
    %s44 = sadd.s32 %s43, 1
    %p47 = scmp.eq.s32.totalorder %s9, 1
    %p48 = scmp.ne.s32.totalorder %s43, %s45
    %p49 = scmp.eq.s32.totalorder %s9, 0
    %p50 = por %p48, %p49
    %p51 = scmp.ne.s32.totalorder %s43, %s45
    %p52 = scmp.eq.s32.totalorder %s14, 1
    %p53 = por %p51, %p52
    %p54 = scmp.ne.s32.totalorder %s45, %s46
    %p55 = scmp.eq.s32.totalorder %s14, 0
    %p56 = por %p54, %p55
    %p57 = scmp.ne.s32.totalorder %s45, %s46
    %p58 = scmp.eq.s32.totalorder %s15, 1
    %p59 = por %p57, %p58
    %p61 = scmp.ne.s32.totalorder %s46, %s60
    %p62 = scmp.eq.s32.totalorder %s15, 0
    %p63 = por %p61, %p62
    %s64 = ssub.s32 %s9, %s16
    %p65 = scmp.eq.s32.totalorder %s64, 0
    %s67 = sadd.s32 %s66, 1
    %s68 = scalar_select %p65, %s66, %s67
    %p71 = pneg %p65
    %p72 = scmp.eq.s32.totalorder %s9, 1
    %p73 = por %p71, %p72
    %p74 = scmp.ne.s32.totalorder %s66, %s69
    %p75 = scmp.eq.s32.totalorder %s9, 0
    %p76 = por %p74, %p75
    %p77 = scmp.ne.s32.totalorder %s66, %s69
    %p78 = scmp.eq.s32.totalorder %s14, 1
    %p79 = por %p77, %p78
    %p80 = scmp.ne.s32.totalorder %s69, %s70
    %p81 = scmp.eq.s32.totalorder %s14, 0
    %p82 = por %p80, %p81
    %p83 = scmp.ne.s32.totalorder %s69, %s70
    %p84 = scmp.eq.s32.totalorder %s15, 1
    %p85 = por %p83, %p84
    %p87 = scmp.ne.s32.totalorder %s70, %s86
    %p88 = scmp.eq.s32.totalorder %s15, 0
    %p89 = por %p87, %p88
    %s90 = ssub.s32 %s9, %s16
    %p91 = scmp.eq.s32.totalorder %s90, 0
    %s93 = sadd.s32 %s92, 1
    %s94 = scalar_select %p91, %s92, %s93
    %p97 = pneg %p91
    %p98 = scmp.eq.s32.totalorder %s9, 1
    %p99 = por %p97, %p98
    %p100 = scmp.ne.s32.totalorder %s92, %s95
    %p101 = scmp.eq.s32.totalorder %s9, 0
    %p102 = por %p100, %p101
    %p103 = scmp.ne.s32.totalorder %s92, %s95
    %p104 = scmp.eq.s32.totalorder %s14, 1
    %p105 = por %p103, %p104
    %p106 = scmp.ne.s32.totalorder %s95, %s96
    %p107 = scmp.eq.s32.totalorder %s14, 0
    %p108 = por %p106, %p107
    %p109 = scmp.ne.s32.totalorder %s95, %s96
    %p110 = scmp.eq.s32.totalorder %s15, 1
    %p111 = por %p109, %p110
    %p113 = scmp.ne.s32.totalorder %s96, %s112
    %p114 = scmp.eq.s32.totalorder %s15, 0
    %p115 = por %p113, %p114
    %p116 = scmp.le.s32.totalorder 1, %s9
    %p117 = scmp.lt.s32.totalorder %s9, 3
    %p118 = pnand %p116, %p117
    %p119 = pneg %p118
    // Predicated region
    $region9: #{basic_block.9} parent=5 // pred_check
      _
    $region10: #{basic_block.9} parent=5 // pred_check_branch
      %121 = sbr.rel (%p118) target = $region12
    $region11: #{basic_block.9} parent=5 // pred_region
      %s122 = ssub.s32 %s9, 1
      // Predicated region
      $region13: #{basic_block.9} parent=11 // pred_check
        %p123 = pneg %p56
      $region14: #{basic_block.9} parent=11 // pred_check_branch
        %125 = sbr.rel (%p123) target = $region16
      $region15: #{basic_block.9} parent=11 // pred_region
        _
      $region16: #{basic_block.9} parent=11 // pred_fallthru
        _
    $region12: #{basic_block.9} parent=5 // pred_fallthru
      _
    %p126 = scmp.lt.s32.totalorder %s9, 2
    // Predicated region
    $region17: #{basic_block.9} parent=5 // pred_check
      %p127 = pneg %p126
    $region18: #{basic_block.9} parent=5 // pred_check_branch
      %129 = sbr.rel (%p127) target = $region20
    $region19: #{basic_block.9} parent=5 // pred_region
      // Predicated region
      $region21: #{basic_block.9} parent=19 // pred_check
        %p130 = pneg %p29
      $region22: #{basic_block.9} parent=19 // pred_check_branch
        %132 = sbr.rel (%p130) target = $region24
      $region23: #{basic_block.9} parent=19 // pred_region
        %p133 = scmp.lt.s32.totalorder %s9, 1
        %s134 = scalar_select %p133, %s9, 1
        %s135 = smul.addr %s134, 2
        %s136 = smul.addr %s135, 8
        %s137 = scalar_lea.vmem %s0, %s136
      $region24: #{basic_block.9} parent=19 // pred_fallthru
        _
      // Predicated region
      $region25: #{basic_block.9} parent=19 // pred_check
        %p138 = pneg %p76
      $region26: #{basic_block.9} parent=19 // pred_check_branch
        %140 = sbr.rel (%p138) target = $region28
      $region27: #{basic_block.9} parent=19 // pred_region
        %p141 = scmp.lt.s32.totalorder %s9, 1
        %s142 = scalar_select %p141, %s9, 1
        %s143 = smul.addr %s142, 2
        %s144 = smul.addr %s143, 8
        %s145 = scalar_lea.vmem %s2, %s144
      $region28: #{basic_block.9} parent=19 // pred_fallthru
        _
    $region20: #{basic_block.9} parent=5 // pred_fallthru
      _
    %p146 = scmp.le.s32.totalorder 1, %s9
    %p147 = scmp.lt.s32.totalorder %s9, 3
    %p148 = pnand %p146, %p147
    %p149 = pneg %p148
    // Predicated region
    $region29: #{basic_block.9} parent=5 // pred_check
      _
    $region30: #{basic_block.9} parent=5 // pred_check_branch
      %151 = sbr.rel (%p148) target = $region32
    $region31: #{basic_block.9} parent=5 // pred_region
      %s152 = ssub.s32 %s9, 1
      %p153 = scmp.lt.s32.totalorder %s14, 1
      %s154 = scalar_select %p153, %s14, 1
      %s155 = smul.addr %s154, 2
      %s156 = smul.addr %s155, 8
      %s157 = scalar_lea.vmem %s0, %s156
      %p158 = pneg %p35
      %p159 = pneg %p32
      %p160 = pneg %p56
      %p161 = pneg %p53
      %p162 = scmp.lt.s32.totalorder %s14, 1
      %s163 = scalar_select %p162, %s14, 1
      %s164 = smul.addr %s163, 2
      %s165 = smul.addr %s164, 8
      %s166 = scalar_lea.vmem %s2, %s165
      %p167 = pneg %p82
      %p168 = pneg %p79
      %p169 = pneg %p108
      %p170 = pneg %p105
      %p171 = scmp.lt.s32.totalorder %s14, 1
      %s172 = scalar_select %p171, %s14, 1
      %s173 = smul.addr %s172, 2
      %s174 = smul.addr %s173, 8
      %s175 = scalar_lea.vmem %s3, %s174
      %p176 = scmp.lt.s32.totalorder %s14, 1
      %s177 = scalar_select %p176, %s14, 1
      %s178 = smul.addr %s177, 2
      %s179 = smul.addr %s178, 8
      %s180 = scalar_lea.vmem %s0, %s179
      %p181 = scmp.lt.s32.totalorder %s14, 1
      %s182 = scalar_select %p181, %s14, 1
      %s183 = smul.addr %s182, 2
      %s184 = smul.addr %s183, 8
      %s185 = scalar_lea.vmem %s2, %s184
      %p186 = scmp.lt.s32.totalorder %s14, 1
      %s187 = scalar_select %p186, %s14, 1
      %s188 = smul.addr %s187, 2
      %s189 = smul.addr %s188, 8
      %s190 = scalar_lea.vmem %s3, %s189
      %v191 = vld [vmem:[%s180] sm:$0xff]
      %v192 = vld [vmem:[%s180 + $0x8] sm:$0xff]
      %v193 = vld [vmem:[%s185] sm:$0xff]
      %v194 = vld [vmem:[%s185 + $0x8] sm:$0xff]
      %v195 = vld [vmem:[%s1] sm:$0x1]
      %v196 = vlaneseq
      %v197 = vshrl.u32 %v196, 7
      %v198 = vsub.s32 0, %v197
      %v199 = vrot.slane %v195, %v198
      %v200 = vmul.f32 %v191, %v199
      %v201 = vmul.f32 %v192, %v199
      %v202 = vld [vmem:[%s1 + $0x1] sm:$0x1]
      %v203 = vlaneseq
      %v204 = vshrl.u32 %v203, 7
      %v205 = vsub.s32 0, %v204
      %v206 = vrot.slane %v202, %v205
      %v207 = vadd.f32 %v200, %v206
      %v208 = vadd.f32 %v201, %v206
      %v209 = vadd.f32 %v207, %v193
      %v210 = vadd.f32 %v208, %v194
      %v211 = vmax.f32 %v209, 0.0
      %v212 = vmax.f32 %v210, 0.0
      %213 = vst [vmem:[%s190] sm:$0xff] %v211
      %214 = vst [vmem:[%s190 + $0x8] sm:$0xff] %v212
      %p215 = scmp.lt.s32.totalorder %s14, 1
      %s216 = scalar_select %p215, %s14, 1
      %s217 = smul.addr %s216, 2
      %s218 = smul.addr %s217, 8
      %s219 = scalar_lea.vmem %s3, %s218
      // Predicated region
      $region33: #{basic_block.9} parent=31 // pred_check
        %p220 = pneg %p105
      $region34: #{basic_block.9} parent=31 // pred_check_branch
        %222 = sbr.rel (%p220) target = $region36
      $region35: #{basic_block.9} parent=31 // pred_region
        _
      $region36: #{basic_block.9} parent=31 // pred_fallthru
        _
    $region32: #{basic_block.9} parent=5 // pred_fallthru
      _
    %p223 = scmp.le.s32.totalorder 2, %s9
    // Predicated region
    $region37: #{basic_block.9} parent=5 // pred_check
      %p224 = pneg %p223
    $region38: #{basic_block.9} parent=5 // pred_check_branch
      %226 = sbr.rel (%p224) target = $region40
    $region39: #{basic_block.9} parent=5 // pred_region
      %s227 = ssub.s32 %s9, 2
      // Predicated region
      $region41: #{basic_block.9} parent=39 // pred_check
        %p228 = pneg %p111
      $region42: #{basic_block.9} parent=39 // pred_check_branch
        %230 = sbr.rel (%p228) target = $region44
      $region43: #{basic_block.9} parent=39 // pred_region
        %p231 = scmp.lt.s32.totalorder %s15, 1
        %s232 = scalar_select %p231, %s15, 1
        %s233 = smul.addr %s232, 2
        %s234 = smul.addr %s233, 8
        %s235 = scalar_lea.vmem %s3, %s234
      $region44: #{basic_block.9} parent=39 // pred_fallthru
        _
    $region40: #{basic_block.9} parent=5 // pred_fallthru
      _
  $region6: #{basic_block.9} parent=0 // loop_footer
    %s13 = sadd.s32 1, %s9
  $region7: #{basic_block.9} parent=0 // loop_footer_branch
    %8 = sbr.rel target = $region3
  $region8: #{basic_block.9} parent=0 // loop_exit
    _

// kernel: basic_block.5
$region0: #{basic_block.5}
  #allocation0 [shape = 'u32[]', space=smem, size = 0x4, offset = 0x4, fixed_abs, tag = 'smem constant byte address 0x4 - core index']
  #allocation1 [shape = 'u32[144,128]{1,0:T(1,128)}', space=vmem, size = 0x12000, scoped, tag = 'internal scratch']
  %s0 = inlined_call_operand.vmem [shape: f32[2,16,128], index: 0, kind: input, shape index: {}]
  %s1 = inlined_call_operand.vmem [shape: f32[3,128,128], index: 1, kind: input, shape index: {}]
  %s2 = inlined_call_operand.vmem [shape: f32[1,128], index: 2, kind: input, shape index: {}]
  %s3 = inlined_call_operand.vmem [shape: f32[2,16,128], index: 3, kind: output, shape index: {0}]
  %s4 = inlined_call_operand.vmem [shape: f32[2,2,128], index: 4, kind: output, shape index: {1}]
  %5 = xla_tuple %s3, %s4
  %s6 = sld [smem:[#allocation0]]
  $region57: #{basic_block.5} parent=0
    _
  %s8 = ssub.s32 1, %s6
  %s9 = scalar_select 0, %s8, %s6
  loop: start=0, step=1, limit=4
  $region2: #{basic_block.5} parent=0 // loop_pre_header
    _
  $region3: #{basic_block.5} parent=0 // loop_header
    %s11 = sphi 0, %s15
    %p12 = scmp.ge.s32.totalorder %s11, 4
    %s18 = sphi 0, %s30
    %s19 = sphi 0, %s26
    %s20 = sphi 0, %s18
    %s21 = sphi 0, %s19
    %s22 = sphi 0, %s20
    %s23 = sphi 0, %s21
    %s35 = sphi 0, %s37
    %s38 = sphi 0, %s35
    %s39 = sphi 0, %s38
    %s55 = sphi 0, %s39
    %s59 = sphi 0, %s59
    %s61 = sphi 0, %s59
    %s62 = sphi 0, %s61
    %s76 = sphi 0, %s62
    %s80 = sphi 0, %s80
    %s82 = sphi 0, %s80
    %s83 = sphi 0, %s82
    %s97 = sphi 0, %s83
    %s105 = sphi 0, %s107
    %s108 = sphi 0, %s105
    %s109 = sphi 0, %s108
    %s125 = sphi 0, %s109
    %s131 = sphi 0, %s133
    %s134 = sphi 0, %s131
    %s135 = sphi 0, %s134
    %s151 = sphi 0, %s135
  $region4: #{basic_block.5} parent=0 // loop_header_branch
    %14 = sbr.rel (%p12) target = $region8
  $region5: #{basic_block.5} parent=0 // loop_body
    %s16 = ssub.s32 %s11, 1
    %s17 = ssub.s32 %s11, 2
    %s24 = sadd.s32 1, %s19
    %p25 = scmp.ge.s32.totalorder %s24, 1
    %s26 = scalar_select %p25, 0, %s24
    %s27 = sadd.s32 1, %s18
    %s28 = scalar_select %p25, %s27, %s18
    %p29 = scmp.ge.s32.totalorder %s28, 2
    %s30 = scalar_select %p29, 0, %s28
    %s31 = sadd.s32 %s18, %s19
    %s32 = sadd.s32 %s30, %s26
    %s33 = ssub.s32 %s31, %s32
    %p34 = scmp.eq.s32.totalorder %s33, 0
    %s36 = sadd.s32 %s35, 1
    %s37 = scalar_select %p34, %s35, %s36
    %p40 = pneg %p34
    %p41 = scmp.eq.s32.totalorder %s11, 1
    %p42 = por %p40, %p41
    %p43 = scmp.ne.s32.totalorder %s35, %s38
    %p44 = scmp.eq.s32.totalorder %s11, 0
    %p45 = por %p43, %p44
    %p46 = scmp.ne.s32.totalorder %s35, %s38
    %p47 = scmp.eq.s32.totalorder %s16, 1
    %p48 = por %p46, %p47
    %p49 = scmp.ne.s32.totalorder %s38, %s39
    %p50 = scmp.eq.s32.totalorder %s16, 0
    %p51 = por %p49, %p50
    %p52 = scmp.ne.s32.totalorder %s38, %s39
    %p53 = scmp.eq.s32.totalorder %s17, 1
    %p54 = por %p52, %p53
    %p56 = scmp.ne.s32.totalorder %s39, %s55
    %p57 = scmp.eq.s32.totalorder %s17, 0
    %p58 = por %p56, %p57
    %s60 = sadd.s32 %s59, 1
    %p63 = scmp.eq.s32.totalorder %s11, 1
    %p64 = scmp.ne.s32.totalorder %s59, %s61
    %p65 = scmp.eq.s32.totalorder %s11, 0
    %p66 = por %p64, %p65
    %p67 = scmp.ne.s32.totalorder %s59, %s61
    %p68 = scmp.eq.s32.totalorder %s16, 1
    %p69 = por %p67, %p68
    %p70 = scmp.ne.s32.totalorder %s61, %s62
    %p71 = scmp.eq.s32.totalorder %s16, 0
    %p72 = por %p70, %p71
    %p73 = scmp.ne.s32.totalorder %s61, %s62
    %p74 = scmp.eq.s32.totalorder %s17, 1
    %p75 = por %p73, %p74
    %p77 = scmp.ne.s32.totalorder %s62, %s76
    %p78 = scmp.eq.s32.totalorder %s17, 0
    %p79 = por %p77, %p78
    %s81 = sadd.s32 %s80, 1
    %p84 = scmp.eq.s32.totalorder %s11, 1
    %p85 = scmp.ne.s32.totalorder %s80, %s82
    %p86 = scmp.eq.s32.totalorder %s11, 0
    %p87 = por %p85, %p86
    %p88 = scmp.ne.s32.totalorder %s80, %s82
    %p89 = scmp.eq.s32.totalorder %s16, 1
    %p90 = por %p88, %p89
    %p91 = scmp.ne.s32.totalorder %s82, %s83
    %p92 = scmp.eq.s32.totalorder %s16, 0
    %p93 = por %p91, %p92
    %p94 = scmp.ne.s32.totalorder %s82, %s83
    %p95 = scmp.eq.s32.totalorder %s17, 1
    %p96 = por %p94, %p95
    %p98 = scmp.ne.s32.totalorder %s83, %s97
    %p99 = scmp.eq.s32.totalorder %s17, 0
    %p100 = por %p98, %p99
    %s101 = sadd.s32 %s18, %s19
    %s102 = sadd.s32 %s30, %s26
    %s103 = ssub.s32 %s101, %s102
    %p104 = scmp.eq.s32.totalorder %s103, 0
    %s106 = sadd.s32 %s105, 1
    %s107 = scalar_select %p104, %s105, %s106
    %p110 = pneg %p104
    %p111 = scmp.eq.s32.totalorder %s11, 1
    %p112 = por %p110, %p111
    %p113 = scmp.ne.s32.totalorder %s105, %s108
    %p114 = scmp.eq.s32.totalorder %s11, 0
    %p115 = por %p113, %p114
    %p116 = scmp.ne.s32.totalorder %s105, %s108
    %p117 = scmp.eq.s32.totalorder %s16, 1
    %p118 = por %p116, %p117
    %p119 = scmp.ne.s32.totalorder %s108, %s109
    %p120 = scmp.eq.s32.totalorder %s16, 0
    %p121 = por %p119, %p120
    %p122 = scmp.ne.s32.totalorder %s108, %s109
    %p123 = scmp.eq.s32.totalorder %s17, 1
    %p124 = por %p122, %p123
    %p126 = scmp.ne.s32.totalorder %s109, %s125
    %p127 = scmp.eq.s32.totalorder %s17, 0
    %p128 = por %p126, %p127
    %s129 = ssub.s32 %s18, %s30
    %p130 = scmp.eq.s32.totalorder %s129, 0
    %s132 = sadd.s32 %s131, 1
    %s133 = scalar_select %p130, %s131, %s132
    %p136 = pneg %p130
    %p137 = scmp.eq.s32.totalorder %s11, 1
    %p138 = por %p136, %p137
    %p139 = scmp.ne.s32.totalorder %s131, %s134
    %p140 = scmp.eq.s32.totalorder %s11, 0
    %p141 = por %p139, %p140
    %p142 = scmp.ne.s32.totalorder %s131, %s134
    %p143 = scmp.eq.s32.totalorder %s16, 1
    %p144 = por %p142, %p143
    %p145 = scmp.ne.s32.totalorder %s134, %s135
    %p146 = scmp.eq.s32.totalorder %s16, 0
    %p147 = por %p145, %p146
    %p148 = scmp.ne.s32.totalorder %s134, %s135
    %p149 = scmp.eq.s32.totalorder %s17, 1
    %p150 = por %p148, %p149
    %p152 = scmp.ne.s32.totalorder %s135, %s151
    %p153 = scmp.eq.s32.totalorder %s17, 0
    %p154 = por %p152, %p153
    %p155 = scmp.le.s32.totalorder 1, %s11
    %p156 = scmp.lt.s32.totalorder %s11, 3
    %p157 = pnand %p155, %p156
    %p158 = pneg %p157
    // Predicated region
    $region9: #{basic_block.5} parent=5 // pred_check
      _
    $region10: #{basic_block.5} parent=5 // pred_check_branch
      %160 = sbr.rel (%p157) target = $region12
    $region11: #{basic_block.5} parent=5 // pred_region
      %s161 = ssub.s32 %s11, 1
      // Predicated region
      $region13: #{basic_block.5} parent=11 // pred_check
        %p162 = pneg %p72
      $region14: #{basic_block.5} parent=11 // pred_check_branch
        %164 = sbr.rel (%p162) target = $region16
      $region15: #{basic_block.5} parent=11 // pred_region
        _
      $region16: #{basic_block.5} parent=11 // pred_fallthru
        _
      // Predicated region
      $region17: #{basic_block.5} parent=11 // pred_check
        %p165 = pneg %p93
      $region18: #{basic_block.5} parent=11 // pred_check_branch
        %167 = sbr.rel (%p165) target = $region20
      $region19: #{basic_block.5} parent=11 // pred_region
        _
      $region20: #{basic_block.5} parent=11 // pred_fallthru
        _
    $region12: #{basic_block.5} parent=5 // pred_fallthru
      _
    %p168 = scmp.lt.s32.totalorder %s11, 2
    // Predicated region
    $region21: #{basic_block.5} parent=5 // pred_check
      %p169 = pneg %p168
    $region22: #{basic_block.5} parent=5 // pred_check_branch
      %171 = sbr.rel (%p169) target = $region24
    $region23: #{basic_block.5} parent=5 // pred_region
      // Predicated region
      $region25: #{basic_block.5} parent=23 // pred_check
        %p172 = pneg %p45
      $region26: #{basic_block.5} parent=23 // pred_check_branch
        %174 = sbr.rel (%p172) target = $region28
      $region27: #{basic_block.5} parent=23 // pred_region
        %s175 = sadd.s32 %s18, %s19
        %p176 = scmp.lt.s32.totalorder %s175, 1
        %s177 = scalar_select %p176, %s175, 1
        %s178 = smul.addr %s177, 2
        %s179 = smul.addr %s178, 8
        %s180 = scalar_lea.vmem %s0, %s179
        %s181 = sadd.s32 %s18, %s19
      $region28: #{basic_block.5} parent=23 // pred_fallthru
        _
    $region24: #{basic_block.5} parent=5 // pred_fallthru
      _
    %p182 = scmp.le.s32.totalorder 1, %s11
    %p183 = scmp.lt.s32.totalorder %s11, 3
    %p184 = pnand %p182, %p183
    %p185 = pneg %p184
    // Predicated region
    $region29: #{basic_block.5} parent=5 // pred_check
      _
    $region30: #{basic_block.5} parent=5 // pred_check_branch
      %187 = sbr.rel (%p184) target = $region32
    $region31: #{basic_block.5} parent=5 // pred_region
      %s188 = ssub.s32 %s11, 1
      %s189 = sadd.s32 %s20, %s21
      %p190 = scmp.lt.s32.totalorder %s189, 1
      %s191 = scalar_select %p190, %s189, 1
      %s192 = smul.addr %s191, 2
      %s193 = smul.addr %s192, 8
      %s194 = scalar_lea.vmem %s0, %s193
      %p195 = pneg %p51
      %p196 = pneg %p48
      %p197 = pneg %p72
      %p198 = pneg %p69
      %p199 = pneg %p93
      %p200 = pneg %p90
      %p201 = pneg %p121
      %p202 = pneg %p118
      %s203 = sadd.s32 %s20, %s21
      %p204 = scmp.lt.s32.totalorder %s203, 1
      %s205 = scalar_select %p204, %s203, 1
      %s206 = smul.addr %s205, 2
      %s207 = smul.addr %s206, 8
      %s208 = scalar_lea.vmem %s3, %s207
      %p209 = pneg %p147
      %p210 = pneg %p144
      %p211 = scmp.lt.s32.totalorder %s20, 1
      %s212 = scalar_select %p211, %s20, 1
      %s213 = smul.addr %s212, 2
      %s214 = scalar_lea.vmem %s4, %s213
      %s215 = sadd.s32 %s20, %s21
      %p216 = scmp.lt.s32.totalorder %s215, 1
      %s217 = scalar_select %p216, %s215, 1
      %s218 = smul.addr %s217, 2
      %s219 = smul.addr %s218, 8
      %s220 = scalar_lea.vmem %s0, %s219
      %s221 = sadd.s32 %s20, %s21
      %s222 = sadd.s32 %s20, %s21
      %p223 = scmp.lt.s32.totalorder %s222, 1
      %s224 = scalar_select %p223, %s222, 1
      %s225 = smul.addr %s224, 2
      %s226 = smul.addr %s225, 8
      %s227 = scalar_lea.vmem %s3, %s226
      %s228 = sadd.s32 %s20, %s21
      %p229 = scmp.lt.s32.totalorder %s20, 1
      %s230 = scalar_select %p229, %s20, 1
      %s231 = smul.addr %s230, 2
      %s232 = scalar_lea.vmem %s4, %s231
      %v233 = vld [vmem:[%s220] sm:$0xff]
      %v234 = vld [vmem:[%s220 + $0x8] sm:$0xff]
      %vm237 = vcmask 1040384
      %v238 = vrot.slane %v233, 7
      %v239 = vrot.slane %v234, 7
      %v240 = vsel %vm237, %v238, %v239
      %v243 = vsel %vm237, 0.0, %v238
      %vm244 = vcmask 1046528
      %v245 = vrot.slane %v233, 1
      %v246 = vrot.slane %v234, 1
      %v247 = vsel %vm244, %v245, %v246
      %v250 = vsel %vm244, %v246, 0.0
      %v251 = vld [vmem:[%s1] sm:$0xff]
      %v252 = vld [vmem:[%s1 + $0x8] sm:$0xff]
      %v253 = vld [vmem:[%s1 + $0x10] sm:$0xff]
      %v254 = vld [vmem:[%s1 + $0x18] sm:$0xff]
      %v255 = vld [vmem:[%s1 + $0x20] sm:$0xff]
      %v256 = vld [vmem:[%s1 + $0x28] sm:$0xff]
      %v257 = vld [vmem:[%s1 + $0x30] sm:$0xff]
      %v258 = vld [vmem:[%s1 + $0x38] sm:$0xff]
      %v259 = vld [vmem:[%s1 + $0x40] sm:$0xff]
      %v260 = vld [vmem:[%s1 + $0x48] sm:$0xff]
      %v261 = vld [vmem:[%s1 + $0x50] sm:$0xff]
      %v262 = vld [vmem:[%s1 + $0x58] sm:$0xff]
      %v263 = vld [vmem:[%s1 + $0x60] sm:$0xff]
      %v264 = vld [vmem:[%s1 + $0x68] sm:$0xff]
      %v265 = vld [vmem:[%s1 + $0x70] sm:$0xff]
      %v266 = vld [vmem:[%s1 + $0x78] sm:$0xff]
      %s267 = scalar_lea.vmem %s1, 128
      %v268 = vld [vmem:[%s267] sm:$0xff]
      %v269 = vld [vmem:[%s267 + $0x8] sm:$0xff]
      %v270 = vld [vmem:[%s267 + $0x10] sm:$0xff]
      %v271 = vld [vmem:[%s267 + $0x18] sm:$0xff]
      %v272 = vld [vmem:[%s267 + $0x20] sm:$0xff]
      %v273 = vld [vmem:[%s267 + $0x28] sm:$0xff]
      %v274 = vld [vmem:[%s267 + $0x30] sm:$0xff]
      %v275 = vld [vmem:[%s267 + $0x38] sm:$0xff]
      %v276 = vld [vmem:[%s267 + $0x40] sm:$0xff]
      %v277 = vld [vmem:[%s267 + $0x48] sm:$0xff]
      %v278 = vld [vmem:[%s267 + $0x50] sm:$0xff]
      %v279 = vld [vmem:[%s267 + $0x58] sm:$0xff]
      %v280 = vld [vmem:[%s267 + $0x60] sm:$0xff]
      %v281 = vld [vmem:[%s267 + $0x68] sm:$0xff]
      %v282 = vld [vmem:[%s267 + $0x70] sm:$0xff]
      %v283 = vld [vmem:[%s267 + $0x78] sm:$0xff]
      %284 = vmatprep.subr.mxu0 0.0
      %285 = vmatpush1.msra.mxu0 %v283
      %286 = vmatprep.subr.mxu0 0.0
      %287 = vmatpush1.msra.mxu0 %v282
      %288 = vmatprep.subr.mxu0 0.0
      %289 = vmatpush1.msra.mxu0 %v281
      %290 = vmatprep.subr.mxu0 0.0
      %291 = vmatpush1.msra.mxu0 %v280
      %292 = vmatprep.subr.mxu0 0.0
      %293 = vmatpush1.msra.mxu0 %v279
      %294 = vmatprep.subr.mxu0 0.0
      %295 = vmatpush1.msra.mxu0 %v278
      %296 = vmatprep.subr.mxu0 0.0
      %297 = vmatpush1.msra.mxu0 %v277
      %298 = vmatprep.subr.mxu0 0.0
      %299 = vmatpush1.msra.mxu0 %v276
      %300 = vmatprep.subr.mxu0 0.0
      %301 = vmatpush1.msra.mxu0 %v275
      %302 = vmatprep.subr.mxu0 0.0
      %303 = vmatpush1.msra.mxu0 %v274
      %304 = vmatprep.subr.mxu0 0.0
      %305 = vmatpush1.msra.mxu0 %v273
      %306 = vmatprep.subr.mxu0 0.0
      %307 = vmatpush1.msra.mxu0 %v272
      %308 = vmatprep.subr.mxu0 0.0
      %309 = vmatpush1.msra.mxu0 %v271
      %310 = vmatprep.subr.mxu0 0.0
      %311 = vmatpush1.msra.mxu0 %v270
      %312 = vmatprep.subr.mxu0 0.0
      %313 = vmatpush1.msra.mxu0 %v269
      %314 = vmatprep.subr.mxu0 0.0
      %315 = vmatpush1.msra.mxu0 %v268
      %316 = vmatprep.subr.mxu0 0.0
      %317 = vmatpush2.msra.mxu0 0.0
      %318 = vmatprep.subr.mxu0 0.0
      %319 = vmatpush2.msra.mxu0 0.0
      %320 = vmatprep.subr.mxu0 0.0
      %321 = vmatpush2.msra.mxu0 0.0
      %322 = vmatprep.subr.mxu0 0.0
      %323 = vmatpush2.msra.mxu0 0.0
      %324 = vmatprep.subr.mxu0 0.0
      %325 = vmatpush2.msra.mxu0 0.0
      %326 = vmatprep.subr.mxu0 0.0
      %327 = vmatpush2.msra.mxu0 0.0
      %328 = vmatprep.subr.mxu0 0.0
      %329 = vmatpush2.msra.mxu0 0.0
      %330 = vmatprep.subr.mxu0 0.0
      %331 = vmatpush2.msra.mxu0 0.0
      %332 = vmatprep.subr.mxu0 0.0
      %333 = vmatpush2.msra.mxu0 0.0
      %334 = vmatprep.subr.mxu0 0.0
      %335 = vmatpush2.msra.mxu0 0.0
      %336 = vmatprep.subr.mxu0 0.0
      %337 = vmatpush2.msra.mxu0 0.0
      %338 = vmatprep.subr.mxu0 0.0
      %339 = vmatpush2.msra.mxu0 0.0
      %340 = vmatprep.subr.mxu0 0.0
      %341 = vmatpush2.msra.mxu0 0.0
      %342 = vmatprep.subr.mxu0 0.0
      %343 = vmatpush2.msra.mxu0 0.0
      %344 = vmatprep.subr.mxu0 0.0
      %345 = vmatpush2.msra.mxu0 0.0
      %346 = vmatprep.subr.mxu0 0.0
      %347 = vmatpush2.msra.mxu0 0.0
      %348 = vmatprep.mubr.f32.mxu0 0.0
      %349 = vmatmul.mubr.f32.gmra.mxu0 %v233
      %v350 = vpop.f32.mrf.mxu0
      %v351 = vadd.f32 0.0, %v350
      %v352 = vpop.f32.mrf.mxu0
      %353 = vmatprep.mubr.f32.mxu0 0.0
      %354 = vmatmul.mubr.f32.gmra.mxu0 %v234
      %v355 = vpop.f32.mrf.mxu0
      %v356 = vadd.f32 0.0, %v355
      %v357 = vpop.f32.mrf.mxu0
      %358 = vdwg.mxu0
      %359 = vmatprep.subr.mxu0 0.0
      %360 = vmatpush1.msra.mxu0 %v266
      %361 = vmatprep.subr.mxu0 0.0
      %362 = vmatpush1.msra.mxu0 %v265
      %363 = vmatprep.subr.mxu0 0.0
      %364 = vmatpush1.msra.mxu0 %v264
      %365 = vmatprep.subr.mxu0 0.0
      %366 = vmatpush1.msra.mxu0 %v263
      %367 = vmatprep.subr.mxu0 0.0
      %368 = vmatpush1.msra.mxu0 %v262
      %369 = vmatprep.subr.mxu0 0.0
      %370 = vmatpush1.msra.mxu0 %v261
      %371 = vmatprep.subr.mxu0 0.0
      %372 = vmatpush1.msra.mxu0 %v260
      %373 = vmatprep.subr.mxu0 0.0
      %374 = vmatpush1.msra.mxu0 %v259
      %375 = vmatprep.subr.mxu0 0.0
      %376 = vmatpush1.msra.mxu0 %v258
      %377 = vmatprep.subr.mxu0 0.0
      %378 = vmatpush1.msra.mxu0 %v257
      %379 = vmatprep.subr.mxu0 0.0
      %380 = vmatpush1.msra.mxu0 %v256
      %381 = vmatprep.subr.mxu0 0.0
      %382 = vmatpush1.msra.mxu0 %v255
      %383 = vmatprep.subr.mxu0 0.0
      %384 = vmatpush1.msra.mxu0 %v254
      %385 = vmatprep.subr.mxu0 0.0
      %386 = vmatpush1.msra.mxu0 %v253
      %387 = vmatprep.subr.mxu0 0.0
      %388 = vmatpush1.msra.mxu0 %v252
      %389 = vmatprep.subr.mxu0 0.0
      %390 = vmatpush1.msra.mxu0 %v251
      %391 = vmatprep.subr.mxu0 0.0
      %392 = vmatpush2.msra.mxu0 0.0
      %393 = vmatprep.subr.mxu0 0.0
      %394 = vmatpush2.msra.mxu0 0.0
      %395 = vmatprep.subr.mxu0 0.0
      %396 = vmatpush2.msra.mxu0 0.0
      %397 = vmatprep.subr.mxu0 0.0
      %398 = vmatpush2.msra.mxu0 0.0
      %399 = vmatprep.subr.mxu0 0.0
      %400 = vmatpush2.msra.mxu0 0.0
      %401 = vmatprep.subr.mxu0 0.0
      %402 = vmatpush2.msra.mxu0 0.0
      %403 = vmatprep.subr.mxu0 0.0
      %404 = vmatpush2.msra.mxu0 0.0
      %405 = vmatprep.subr.mxu0 0.0
      %406 = vmatpush2.msra.mxu0 0.0
      %407 = vmatprep.subr.mxu0 0.0
      %408 = vmatpush2.msra.mxu0 0.0
      %409 = vmatprep.subr.mxu0 0.0
      %410 = vmatpush2.msra.mxu0 0.0
      %411 = vmatprep.subr.mxu0 0.0
      %412 = vmatpush2.msra.mxu0 0.0
      %413 = vmatprep.subr.mxu0 0.0
      %414 = vmatpush2.msra.mxu0 0.0
      %415 = vmatprep.subr.mxu0 0.0
      %416 = vmatpush2.msra.mxu0 0.0
      %417 = vmatprep.subr.mxu0 0.0
      %418 = vmatpush2.msra.mxu0 0.0
      %419 = vmatprep.subr.mxu0 0.0
      %420 = vmatpush2.msra.mxu0 0.0
      %421 = vmatprep.subr.mxu0 0.0
      %422 = vmatpush2.msra.mxu0 0.0
      %423 = vmatprep.mubr.f32.mxu0 0.0
      %424 = vmatmul.mubr.f32.gmra.mxu0 %v243
      %v425 = vpop.f32.mrf.mxu0
      %v426 = vadd.f32 %v351, %v425
      %v427 = vpop.f32.mrf.mxu0
      %428 = vmatprep.mubr.f32.mxu0 0.0
      %429 = vmatmul.mubr.f32.gmra.mxu0 %v240
      %v430 = vpop.f32.mrf.mxu0
      %v431 = vadd.f32 %v356, %v430
      %v432 = vpop.f32.mrf.mxu0
      %433 = vdwg.mxu0
      %s434 = scalar_lea.vmem %s1, 256
      %v435 = vld [vmem:[%s434] sm:$0xff]
      %v436 = vld [vmem:[%s434 + $0x8] sm:$0xff]
      %v437 = vld [vmem:[%s434 + $0x10] sm:$0xff]
      %v438 = vld [vmem:[%s434 + $0x18] sm:$0xff]
      %v439 = vld [vmem:[%s434 + $0x20] sm:$0xff]
      %v440 = vld [vmem:[%s434 + $0x28] sm:$0xff]
      %v441 = vld [vmem:[%s434 + $0x30] sm:$0xff]
      %v442 = vld [vmem:[%s434 + $0x38] sm:$0xff]
      %v443 = vld [vmem:[%s434 + $0x40] sm:$0xff]
      %v444 = vld [vmem:[%s434 + $0x48] sm:$0xff]
      %v445 = vld [vmem:[%s434 + $0x50] sm:$0xff]
      %v446 = vld [vmem:[%s434 + $0x58] sm:$0xff]
      %v447 = vld [vmem:[%s434 + $0x60] sm:$0xff]
      %v448 = vld [vmem:[%s434 + $0x68] sm:$0xff]
      %v449 = vld [vmem:[%s434 + $0x70] sm:$0xff]
      %v450 = vld [vmem:[%s434 + $0x78] sm:$0xff]
      %451 = vmatprep.subr.mxu0 0.0
      %452 = vmatpush1.msra.mxu0 %v450
      %453 = vmatprep.subr.mxu0 0.0
      %454 = vmatpush1.msra.mxu0 %v449
      %455 = vmatprep.subr.mxu0 0.0
      %456 = vmatpush1.msra.mxu0 %v448
      %457 = vmatprep.subr.mxu0 0.0
      %458 = vmatpush1.msra.mxu0 %v447
      %459 = vmatprep.subr.mxu0 0.0
      %460 = vmatpush1.msra.mxu0 %v446
      %461 = vmatprep.subr.mxu0 0.0
      %462 = vmatpush1.msra.mxu0 %v445
      %463 = vmatprep.subr.mxu0 0.0
      %464 = vmatpush1.msra.mxu0 %v444
      %465 = vmatprep.subr.mxu0 0.0
      %466 = vmatpush1.msra.mxu0 %v443
      %467 = vmatprep.subr.mxu0 0.0
      %468 = vmatpush1.msra.mxu0 %v442
      %469 = vmatprep.subr.mxu0 0.0
      %470 = vmatpush1.msra.mxu0 %v441
      %471 = vmatprep.subr.mxu0 0.0
      %472 = vmatpush1.msra.mxu0 %v440
      %473 = vmatprep.subr.mxu0 0.0
      %474 = vmatpush1.msra.mxu0 %v439
      %475 = vmatprep.subr.mxu0 0.0
      %476 = vmatpush1.msra.mxu0 %v438
      %477 = vmatprep.subr.mxu0 0.0
      %478 = vmatpush1.msra.mxu0 %v437
      %479 = vmatprep.subr.mxu0 0.0
      %480 = vmatpush1.msra.mxu0 %v436
      %481 = vmatprep.subr.mxu0 0.0
      %482 = vmatpush1.msra.mxu0 %v435
      %483 = vmatprep.subr.mxu0 0.0
      %484 = vmatpush2.msra.mxu0 0.0
      %485 = vmatprep.subr.mxu0 0.0
      %486 = vmatpush2.msra.mxu0 0.0
      %487 = vmatprep.subr.mxu0 0.0
      %488 = vmatpush2.msra.mxu0 0.0
      %489 = vmatprep.subr.mxu0 0.0
      %490 = vmatpush2.msra.mxu0 0.0
      %491 = vmatprep.subr.mxu0 0.0
      %492 = vmatpush2.msra.mxu0 0.0
      %493 = vmatprep.subr.mxu0 0.0
      %494 = vmatpush2.msra.mxu0 0.0
      %495 = vmatprep.subr.mxu0 0.0
      %496 = vmatpush2.msra.mxu0 0.0
      %497 = vmatprep.subr.mxu0 0.0
      %498 = vmatpush2.msra.mxu0 0.0
      %499 = vmatprep.subr.mxu0 0.0
      %500 = vmatpush2.msra.mxu0 0.0
      %501 = vmatprep.subr.mxu0 0.0
      %502 = vmatpush2.msra.mxu0 0.0
      %503 = vmatprep.subr.mxu0 0.0
      %504 = vmatpush2.msra.mxu0 0.0
      %505 = vmatprep.subr.mxu0 0.0
      %506 = vmatpush2.msra.mxu0 0.0
      %507 = vmatprep.subr.mxu0 0.0
      %508 = vmatpush2.msra.mxu0 0.0
      %509 = vmatprep.subr.mxu0 0.0
      %510 = vmatpush2.msra.mxu0 0.0
      %511 = vmatprep.subr.mxu0 0.0
      %512 = vmatpush2.msra.mxu0 0.0
      %513 = vmatprep.subr.mxu0 0.0
      %514 = vmatpush2.msra.mxu0 0.0
      %515 = vmatprep.mubr.f32.mxu0 0.0
      %516 = vmatmul.mubr.f32.gmra.mxu0 %v247
      %v517 = vpop.f32.mrf.mxu0
      %v518 = vadd.f32 0.0, %v517
      %v519 = vpop.f32.mrf.mxu0
      %520 = vmatprep.mubr.f32.mxu0 0.0
      %521 = vmatmul.mubr.f32.gmra.mxu0 %v250
      %v522 = vpop.f32.mrf.mxu0
      %v523 = vadd.f32 0.0, %v522
      %v524 = vpop.f32.mrf.mxu0
      %525 = vdwg.mxu0
      %v526 = vadd.f32 %v426, %v518
      %v527 = vadd.f32 %v431, %v523
      %v528 = vld [vmem:[%s2] sm:$0x1]
      %v530 = vlaneseq
      %v531 = vshrl.u32 %v530, 7
      %v532 = vsub.s32 0, %v531
      %v533 = vrot.slane %v528, %v532
      %v535 = vadd.f32 %v526, %v533
      %v536 = vadd.f32 %v527, %v533
      %537 = vst [vmem:[%s227] sm:$0xff] %v535
      %538 = vst [vmem:[%s227 + $0x8] sm:$0xff] %v536
      %p539 = scmp.eq.s32.totalorder %s21, 0
      // Predicated region
      $region33: #{basic_block.5} parent=31 // pred_check
        %p540 = pneg %p539
      $region34: #{basic_block.5} parent=31 // pred_check_branch
        %542 = sbr.rel (%p540) target = $region36
      $region35: #{basic_block.5} parent=31 // pred_region
        %543 = vst [vmem:[%s232] sm:$0x3] 0.0
      $region36: #{basic_block.5} parent=31 // pred_fallthru
        _
      %v544 = vld [vmem:[%s232] sm:$0x1]
      %v545 = vadd.f32 %v535, %v536
      %v546 = vrot.slane %v545, 4
      %v547 = vadd.f32 %v545, %v546
      %v548 = vrot.slane %v547, 2
      %v549 = vadd.f32 %v547, %v548
      %v550 = vrot.slane %v549, 1
      %v551 = vadd.f32 %v549, %v550
      %v552 = vadd.f32 %v544, %v551
      %553 = vst [vmem:[%s232] sm:$0x1] %v552
      %v554 = vld [vmem:[%s232 + $0x1] sm:$0x1]
      %v555 = vmul.f32 %v535, %v535
      %v556 = vmul.f32 %v536, %v536
      %v557 = vadd.f32 %v555, %v556
      %v558 = vrot.slane %v557, 4
      %v559 = vadd.f32 %v557, %v558
      %v560 = vrot.slane %v559, 2
      %v561 = vadd.f32 %v559, %v560
      %v562 = vrot.slane %v561, 1
      %v563 = vadd.f32 %v561, %v562
      %v564 = vadd.f32 %v554, %v563
      %565 = vst [vmem:[%s232 + $0x1] sm:$0x1] %v564
      %s566 = sadd.s32 %s20, %s21
      %p567 = scmp.lt.s32.totalorder %s566, 1
      %s568 = scalar_select %p567, %s566, 1
      %s569 = smul.addr %s568, 2
      %s570 = smul.addr %s569, 8
      %s571 = scalar_lea.vmem %s3, %s570
      %p572 = scmp.lt.s32.totalorder %s20, 1
      %s573 = scalar_select %p572, %s20, 1
      %s574 = smul.addr %s573, 2
      %s575 = scalar_lea.vmem %s4, %s574
      // Predicated region
      $region37: #{basic_block.5} parent=31 // pred_check
        %p576 = pneg %p118
      $region38: #{basic_block.5} parent=31 // pred_check_branch
        %578 = sbr.rel (%p576) target = $region40
      $region39: #{basic_block.5} parent=31 // pred_region
        %s579 = sadd.s32 %s20, %s21
      $region40: #{basic_block.5} parent=31 // pred_fallthru
        _
      // Predicated region
      $region41: #{basic_block.5} parent=31 // pred_check
        %p580 = pneg %p144
      $region42: #{basic_block.5} parent=31 // pred_check_branch
        %582 = sbr.rel (%p580) target = $region44
      $region43: #{basic_block.5} parent=31 // pred_region
        _
      $region44: #{basic_block.5} parent=31 // pred_fallthru
        _
    $region32: #{basic_block.5} parent=5 // pred_fallthru
      _
    %p583 = scmp.le.s32.totalorder 2, %s11
    // Predicated region
    $region45: #{basic_block.5} parent=5 // pred_check
      %p584 = pneg %p583
    $region46: #{basic_block.5} parent=5 // pred_check_branch
      %586 = sbr.rel (%p584) target = $region48
    $region47: #{basic_block.5} parent=5 // pred_region
      %s587 = ssub.s32 %s11, 2
      // Predicated region
      $region49: #{basic_block.5} parent=47 // pred_check
        %p588 = pneg %p124
      $region50: #{basic_block.5} parent=47 // pred_check_branch
        %590 = sbr.rel (%p588) target = $region52
      $region51: #{basic_block.5} parent=47 // pred_region
        %s591 = sadd.s32 %s22, %s23
        %p592 = scmp.lt.s32.totalorder %s591, 1
        %s593 = scalar_select %p592, %s591, 1
        %s594 = smul.addr %s593, 2
        %s595 = smul.addr %s594, 8
        %s596 = scalar_lea.vmem %s3, %s595
      $region52: #{basic_block.5} parent=47 // pred_fallthru
        _
      // Predicated region
      $region53: #{basic_block.5} parent=47 // pred_check
        %p597 = pneg %p150
      $region54: #{basic_block.5} parent=47 // pred_check_branch
        %599 = sbr.rel (%p597) target = $region56
      $region55: #{basic_block.5} parent=47 // pred_region
        %p600 = scmp.lt.s32.totalorder %s22, 1
        %s601 = scalar_select %p600, %s22, 1
        %s602 = smul.addr %s601, 2
        %s603 = scalar_lea.vmem %s4, %s602
      $region56: #{basic_block.5} parent=47 // pred_fallthru
        _
    $region48: #{basic_block.5} parent=5 // pred_fallthru
      _
  $region6: #{basic_block.5} parent=0 // loop_footer
    %s15 = sadd.s32 1, %s11
  $region7: #{basic_block.5} parent=0 // loop_footer_branch
    %10 = sbr.rel target = $region3
  $region8: #{basic_block.5} parent=0 // loop_exit
    _

// kernel: basic_block.7
$region0: #{basic_block.7}
  #allocation0 [shape = 'u32[]', space=smem, size = 0x4, offset = 0x4, fixed_abs, tag = 'smem constant byte address 0x4 - core index']
  #allocation1 [shape = 'u32[144,128]{1,0:T(1,128)}', space=vmem, size = 0x12000, scoped, tag = 'internal scratch']
  %s0 = inlined_call_operand.vmem [shape: f32[2,16,128], index: 0, kind: input, shape index: {}, may-alias: {0,3}]
  %s1 = inlined_call_operand.vmem [shape: f32[3,128,128], index: 1, kind: input, shape index: {}]
  %s2 = inlined_call_operand.vmem [shape: f32[2,128], index: 2, kind: input, shape index: {}]
  %s3 = inlined_call_operand.vmem [shape: f32[2,16,128], index: 3, kind: output, shape index: {0}, may-alias: {0,3}]
  %s4 = inlined_call_operand.vmem [shape: f32[2,2,128], index: 4, kind: output, shape index: {1}]
  %5 = xla_tuple %s3, %s4
  %s6 = sld [smem:[#allocation0]]
  $region57: #{basic_block.7} parent=0
    _
  %s8 = ssub.s32 1, %s6
  %s9 = scalar_select 0, %s8, %s6
  loop: start=0, step=1, limit=4
  $region2: #{basic_block.7} parent=0 // loop_pre_header
    _
  $region3: #{basic_block.7} parent=0 // loop_header
    %s11 = sphi 0, %s15
    %p12 = scmp.ge.s32.totalorder %s11, 4
    %s18 = sphi 0, %s30
    %s19 = sphi 0, %s26
    %s20 = sphi 0, %s18
    %s21 = sphi 0, %s19
    %s22 = sphi 0, %s20
    %s23 = sphi 0, %s21
    %s35 = sphi 0, %s37
    %s38 = sphi 0, %s35
    %s39 = sphi 0, %s38
    %s55 = sphi 0, %s39
    %s59 = sphi 0, %s59
    %s61 = sphi 0, %s59
    %s62 = sphi 0, %s61
    %s76 = sphi 0, %s62
    %s80 = sphi 0, %s80
    %s82 = sphi 0, %s80
    %s83 = sphi 0, %s82
    %s97 = sphi 0, %s83
    %s105 = sphi 0, %s107
    %s108 = sphi 0, %s105
    %s109 = sphi 0, %s108
    %s125 = sphi 0, %s109
    %s131 = sphi 0, %s133
    %s134 = sphi 0, %s131
    %s135 = sphi 0, %s134
    %s151 = sphi 0, %s135
  $region4: #{basic_block.7} parent=0 // loop_header_branch
    %14 = sbr.rel (%p12) target = $region8
  $region5: #{basic_block.7} parent=0 // loop_body
    %s16 = ssub.s32 %s11, 1
    %s17 = ssub.s32 %s11, 2
    %s24 = sadd.s32 1, %s19
    %p25 = scmp.ge.s32.totalorder %s24, 1
    %s26 = scalar_select %p25, 0, %s24
    %s27 = sadd.s32 1, %s18
    %s28 = scalar_select %p25, %s27, %s18
    %p29 = scmp.ge.s32.totalorder %s28, 2
    %s30 = scalar_select %p29, 0, %s28
    %s31 = sadd.s32 %s18, %s19
    %s32 = sadd.s32 %s30, %s26
    %s33 = ssub.s32 %s31, %s32
    %p34 = scmp.eq.s32.totalorder %s33, 0
    %s36 = sadd.s32 %s35, 1
    %s37 = scalar_select %p34, %s35, %s36
    %p40 = pneg %p34
    %p41 = scmp.eq.s32.totalorder %s11, 1
    %p42 = por %p40, %p41
    %p43 = scmp.ne.s32.totalorder %s35, %s38
    %p44 = scmp.eq.s32.totalorder %s11, 0
    %p45 = por %p43, %p44
    %p46 = scmp.ne.s32.totalorder %s35, %s38
    %p47 = scmp.eq.s32.totalorder %s16, 1
    %p48 = por %p46, %p47
    %p49 = scmp.ne.s32.totalorder %s38, %s39
    %p50 = scmp.eq.s32.totalorder %s16, 0
    %p51 = por %p49, %p50
    %p52 = scmp.ne.s32.totalorder %s38, %s39
    %p53 = scmp.eq.s32.totalorder %s17, 1
    %p54 = por %p52, %p53
    %p56 = scmp.ne.s32.totalorder %s39, %s55
    %p57 = scmp.eq.s32.totalorder %s17, 0
    %p58 = por %p56, %p57
    %s60 = sadd.s32 %s59, 1
    %p63 = scmp.eq.s32.totalorder %s11, 1
    %p64 = scmp.ne.s32.totalorder %s59, %s61
    %p65 = scmp.eq.s32.totalorder %s11, 0
    %p66 = por %p64, %p65
    %p67 = scmp.ne.s32.totalorder %s59, %s61
    %p68 = scmp.eq.s32.totalorder %s16, 1
    %p69 = por %p67, %p68
    %p70 = scmp.ne.s32.totalorder %s61, %s62
    %p71 = scmp.eq.s32.totalorder %s16, 0
    %p72 = por %p70, %p71
    %p73 = scmp.ne.s32.totalorder %s61, %s62
    %p74 = scmp.eq.s32.totalorder %s17, 1
    %p75 = por %p73, %p74
    %p77 = scmp.ne.s32.totalorder %s62, %s76
    %p78 = scmp.eq.s32.totalorder %s17, 0
    %p79 = por %p77, %p78
    %s81 = sadd.s32 %s80, 1
    %p84 = scmp.eq.s32.totalorder %s11, 1
    %p85 = scmp.ne.s32.totalorder %s80, %s82
    %p86 = scmp.eq.s32.totalorder %s11, 0
    %p87 = por %p85, %p86
    %p88 = scmp.ne.s32.totalorder %s80, %s82
    %p89 = scmp.eq.s32.totalorder %s16, 1
    %p90 = por %p88, %p89
    %p91 = scmp.ne.s32.totalorder %s82, %s83
    %p92 = scmp.eq.s32.totalorder %s16, 0
    %p93 = por %p91, %p92
    %p94 = scmp.ne.s32.totalorder %s82, %s83
    %p95 = scmp.eq.s32.totalorder %s17, 1
    %p96 = por %p94, %p95
    %p98 = scmp.ne.s32.totalorder %s83, %s97
    %p99 = scmp.eq.s32.totalorder %s17, 0
    %p100 = por %p98, %p99
    %s101 = sadd.s32 %s18, %s19
    %s102 = sadd.s32 %s30, %s26
    %s103 = ssub.s32 %s101, %s102
    %p104 = scmp.eq.s32.totalorder %s103, 0
    %s106 = sadd.s32 %s105, 1
    %s107 = scalar_select %p104, %s105, %s106
    %p110 = pneg %p104
    %p111 = scmp.eq.s32.totalorder %s11, 1
    %p112 = por %p110, %p111
    %p113 = scmp.ne.s32.totalorder %s105, %s108
    %p114 = scmp.eq.s32.totalorder %s11, 0
    %p115 = por %p113, %p114
    %p116 = scmp.ne.s32.totalorder %s105, %s108
    %p117 = scmp.eq.s32.totalorder %s16, 1
    %p118 = por %p116, %p117
    %p119 = scmp.ne.s32.totalorder %s108, %s109
    %p120 = scmp.eq.s32.totalorder %s16, 0
    %p121 = por %p119, %p120
    %p122 = scmp.ne.s32.totalorder %s108, %s109
    %p123 = scmp.eq.s32.totalorder %s17, 1
    %p124 = por %p122, %p123
    %p126 = scmp.ne.s32.totalorder %s109, %s125
    %p127 = scmp.eq.s32.totalorder %s17, 0
    %p128 = por %p126, %p127
    %s129 = ssub.s32 %s18, %s30
    %p130 = scmp.eq.s32.totalorder %s129, 0
    %s132 = sadd.s32 %s131, 1
    %s133 = scalar_select %p130, %s131, %s132
    %p136 = pneg %p130
    %p137 = scmp.eq.s32.totalorder %s11, 1
    %p138 = por %p136, %p137
    %p139 = scmp.ne.s32.totalorder %s131, %s134
    %p140 = scmp.eq.s32.totalorder %s11, 0
    %p141 = por %p139, %p140
    %p142 = scmp.ne.s32.totalorder %s131, %s134
    %p143 = scmp.eq.s32.totalorder %s16, 1
    %p144 = por %p142, %p143
    %p145 = scmp.ne.s32.totalorder %s134, %s135
    %p146 = scmp.eq.s32.totalorder %s16, 0
    %p147 = por %p145, %p146
    %p148 = scmp.ne.s32.totalorder %s134, %s135
    %p149 = scmp.eq.s32.totalorder %s17, 1
    %p150 = por %p148, %p149
    %p152 = scmp.ne.s32.totalorder %s135, %s151
    %p153 = scmp.eq.s32.totalorder %s17, 0
    %p154 = por %p152, %p153
    %p155 = scmp.le.s32.totalorder 1, %s11
    %p156 = scmp.lt.s32.totalorder %s11, 3
    %p157 = pnand %p155, %p156
    %p158 = pneg %p157
    // Predicated region
    $region9: #{basic_block.7} parent=5 // pred_check
      _
    $region10: #{basic_block.7} parent=5 // pred_check_branch
      %160 = sbr.rel (%p157) target = $region12
    $region11: #{basic_block.7} parent=5 // pred_region
      %s161 = ssub.s32 %s11, 1
      // Predicated region
      $region13: #{basic_block.7} parent=11 // pred_check
        %p162 = pneg %p72
      $region14: #{basic_block.7} parent=11 // pred_check_branch
        %164 = sbr.rel (%p162) target = $region16
      $region15: #{basic_block.7} parent=11 // pred_region
        _
      $region16: #{basic_block.7} parent=11 // pred_fallthru
        _
      // Predicated region
      $region17: #{basic_block.7} parent=11 // pred_check
        %p165 = pneg %p93
      $region18: #{basic_block.7} parent=11 // pred_check_branch
        %167 = sbr.rel (%p165) target = $region20
      $region19: #{basic_block.7} parent=11 // pred_region
        _
      $region20: #{basic_block.7} parent=11 // pred_fallthru
        _
    $region12: #{basic_block.7} parent=5 // pred_fallthru
      _
    %p168 = scmp.lt.s32.totalorder %s11, 2
    // Predicated region
    $region21: #{basic_block.7} parent=5 // pred_check
      %p169 = pneg %p168
    $region22: #{basic_block.7} parent=5 // pred_check_branch
      %171 = sbr.rel (%p169) target = $region24
    $region23: #{basic_block.7} parent=5 // pred_region
      // Predicated region
      $region25: #{basic_block.7} parent=23 // pred_check
        %p172 = pneg %p45
      $region26: #{basic_block.7} parent=23 // pred_check_branch
        %174 = sbr.rel (%p172) target = $region28
      $region27: #{basic_block.7} parent=23 // pred_region
        %s175 = sadd.s32 %s18, %s19
        %p176 = scmp.lt.s32.totalorder %s175, 1
        %s177 = scalar_select %p176, %s175, 1
        %s178 = smul.addr %s177, 2
        %s179 = smul.addr %s178, 8
        %s180 = scalar_lea.vmem %s0, %s179
        %s181 = sadd.s32 %s18, %s19
      $region28: #{basic_block.7} parent=23 // pred_fallthru
        _
    $region24: #{basic_block.7} parent=5 // pred_fallthru
      _
    %p182 = scmp.le.s32.totalorder 1, %s11
    %p183 = scmp.lt.s32.totalorder %s11, 3
    %p184 = pnand %p182, %p183
    %p185 = pneg %p184
    // Predicated region
    $region29: #{basic_block.7} parent=5 // pred_check
      _
    $region30: #{basic_block.7} parent=5 // pred_check_branch
      %187 = sbr.rel (%p184) target = $region32
    $region31: #{basic_block.7} parent=5 // pred_region
      %s188 = ssub.s32 %s11, 1
      %s189 = sadd.s32 %s20, %s21
      %p190 = scmp.lt.s32.totalorder %s189, 1
      %s191 = scalar_select %p190, %s189, 1
      %s192 = smul.addr %s191, 2
      %s193 = smul.addr %s192, 8
      %s194 = scalar_lea.vmem %s0, %s193
      %p195 = pneg %p51
      %p196 = pneg %p48
      %p197 = pneg %p72
      %p198 = pneg %p69
      %p199 = pneg %p93
      %p200 = pneg %p90
      %p201 = pneg %p121
      %p202 = pneg %p118
      %s203 = sadd.s32 %s20, %s21
      %p204 = scmp.lt.s32.totalorder %s203, 1
      %s205 = scalar_select %p204, %s203, 1
      %s206 = smul.addr %s205, 2
      %s207 = smul.addr %s206, 8
      %s208 = scalar_lea.vmem %s3, %s207
      %p209 = pneg %p147
      %p210 = pneg %p144
      %p211 = scmp.lt.s32.totalorder %s20, 1
      %s212 = scalar_select %p211, %s20, 1
      %s213 = smul.addr %s212, 2
      %s214 = scalar_lea.vmem %s4, %s213
      %s215 = sadd.s32 %s20, %s21
      %p216 = scmp.lt.s32.totalorder %s215, 1
      %s217 = scalar_select %p216, %s215, 1
      %s218 = smul.addr %s217, 2
      %s219 = smul.addr %s218, 8
      %s220 = scalar_lea.vmem %s0, %s219
      %s221 = sadd.s32 %s20, %s21
      %s222 = sadd.s32 %s20, %s21
      %p223 = scmp.lt.s32.totalorder %s222, 1
      %s224 = scalar_select %p223, %s222, 1
      %s225 = smul.addr %s224, 2
      %s226 = smul.addr %s225, 8
      %s227 = scalar_lea.vmem %s3, %s226
      %s228 = sadd.s32 %s20, %s21
      %p229 = scmp.lt.s32.totalorder %s20, 1
      %s230 = scalar_select %p229, %s20, 1
      %s231 = smul.addr %s230, 2
      %s232 = scalar_lea.vmem %s4, %s231
      %v233 = vld [vmem:[%s220] sm:$0xff]
      %v234 = vld [vmem:[%s220 + $0x8] sm:$0xff]
      %v235 = vld [vmem:[%s2] sm:$0x1]
      %v236 = vlaneseq
      %v237 = vshrl.u32 %v236, 7
      %v238 = vsub.s32 0, %v237
      %v239 = vrot.slane %v235, %v238
      %v240 = vmul.f32 %v233, %v239
      %v241 = vmul.f32 %v234, %v239
      %v242 = vld [vmem:[%s2 + $0x1] sm:$0x1]
      %v243 = vlaneseq
      %v244 = vshrl.u32 %v243, 7
      %v245 = vsub.s32 0, %v244
      %v246 = vrot.slane %v242, %v245
      %v247 = vadd.f32 %v240, %v246
      %v248 = vadd.f32 %v241, %v246
      %v249 = vmax.f32 %v247, 0.0
      %v250 = vmax.f32 %v248, 0.0
      %vm253 = vcmask 1040384
      %v254 = vrot.slane %v249, 7
      %v255 = vrot.slane %v250, 7
      %v256 = vsel %vm253, %v254, %v255
      %v259 = vsel %vm253, 0.0, %v254
      %vm260 = vcmask 1046528
      %v261 = vrot.slane %v249, 1
      %v262 = vrot.slane %v250, 1
      %v263 = vsel %vm260, %v261, %v262
      %v266 = vsel %vm260, %v262, 0.0
      %v267 = vld [vmem:[%s1] sm:$0xff]
      %v268 = vld [vmem:[%s1 + $0x8] sm:$0xff]
      %v269 = vld [vmem:[%s1 + $0x10] sm:$0xff]
      %v270 = vld [vmem:[%s1 + $0x18] sm:$0xff]
      %v271 = vld [vmem:[%s1 + $0x20] sm:$0xff]
      %v272 = vld [vmem:[%s1 + $0x28] sm:$0xff]
      %v273 = vld [vmem:[%s1 + $0x30] sm:$0xff]
      %v274 = vld [vmem:[%s1 + $0x38] sm:$0xff]
      %v275 = vld [vmem:[%s1 + $0x40] sm:$0xff]
      %v276 = vld [vmem:[%s1 + $0x48] sm:$0xff]
      %v277 = vld [vmem:[%s1 + $0x50] sm:$0xff]
      %v278 = vld [vmem:[%s1 + $0x58] sm:$0xff]
      %v279 = vld [vmem:[%s1 + $0x60] sm:$0xff]
      %v280 = vld [vmem:[%s1 + $0x68] sm:$0xff]
      %v281 = vld [vmem:[%s1 + $0x70] sm:$0xff]
      %v282 = vld [vmem:[%s1 + $0x78] sm:$0xff]
      %s283 = scalar_lea.vmem %s1, 128
      %v284 = vld [vmem:[%s283] sm:$0xff]
      %v285 = vld [vmem:[%s283 + $0x8] sm:$0xff]
      %v286 = vld [vmem:[%s283 + $0x10] sm:$0xff]
      %v287 = vld [vmem:[%s283 + $0x18] sm:$0xff]
      %v288 = vld [vmem:[%s283 + $0x20] sm:$0xff]
      %v289 = vld [vmem:[%s283 + $0x28] sm:$0xff]
      %v290 = vld [vmem:[%s283 + $0x30] sm:$0xff]
      %v291 = vld [vmem:[%s283 + $0x38] sm:$0xff]
      %v292 = vld [vmem:[%s283 + $0x40] sm:$0xff]
      %v293 = vld [vmem:[%s283 + $0x48] sm:$0xff]
      %v294 = vld [vmem:[%s283 + $0x50] sm:$0xff]
      %v295 = vld [vmem:[%s283 + $0x58] sm:$0xff]
      %v296 = vld [vmem:[%s283 + $0x60] sm:$0xff]
      %v297 = vld [vmem:[%s283 + $0x68] sm:$0xff]
      %v298 = vld [vmem:[%s283 + $0x70] sm:$0xff]
      %v299 = vld [vmem:[%s283 + $0x78] sm:$0xff]
      %300 = vmatprep.subr.mxu0 0.0
      %301 = vmatpush1.msra.mxu0 %v299
      %302 = vmatprep.subr.mxu0 0.0
      %303 = vmatpush1.msra.mxu0 %v298
      %304 = vmatprep.subr.mxu0 0.0
      %305 = vmatpush1.msra.mxu0 %v297
      %306 = vmatprep.subr.mxu0 0.0
      %307 = vmatpush1.msra.mxu0 %v296
      %308 = vmatprep.subr.mxu0 0.0
      %309 = vmatpush1.msra.mxu0 %v295
      %310 = vmatprep.subr.mxu0 0.0
      %311 = vmatpush1.msra.mxu0 %v294
      %312 = vmatprep.subr.mxu0 0.0
      %313 = vmatpush1.msra.mxu0 %v293
      %314 = vmatprep.subr.mxu0 0.0
      %315 = vmatpush1.msra.mxu0 %v292
      %316 = vmatprep.subr.mxu0 0.0
      %317 = vmatpush1.msra.mxu0 %v291
      %318 = vmatprep.subr.mxu0 0.0
      %319 = vmatpush1.msra.mxu0 %v290
      %320 = vmatprep.subr.mxu0 0.0
      %321 = vmatpush1.msra.mxu0 %v289
      %322 = vmatprep.subr.mxu0 0.0
      %323 = vmatpush1.msra.mxu0 %v288
      %324 = vmatprep.subr.mxu0 0.0
      %325 = vmatpush1.msra.mxu0 %v287
      %326 = vmatprep.subr.mxu0 0.0
      %327 = vmatpush1.msra.mxu0 %v286
      %328 = vmatprep.subr.mxu0 0.0
      %329 = vmatpush1.msra.mxu0 %v285
      %330 = vmatprep.subr.mxu0 0.0
      %331 = vmatpush1.msra.mxu0 %v284
      %332 = vmatprep.subr.mxu0 0.0
      %333 = vmatpush2.msra.mxu0 0.0
      %334 = vmatprep.subr.mxu0 0.0
      %335 = vmatpush2.msra.mxu0 0.0
      %336 = vmatprep.subr.mxu0 0.0
      %337 = vmatpush2.msra.mxu0 0.0
      %338 = vmatprep.subr.mxu0 0.0
      %339 = vmatpush2.msra.mxu0 0.0
      %340 = vmatprep.subr.mxu0 0.0
      %341 = vmatpush2.msra.mxu0 0.0
      %342 = vmatprep.subr.mxu0 0.0
      %343 = vmatpush2.msra.mxu0 0.0
      %344 = vmatprep.subr.mxu0 0.0
      %345 = vmatpush2.msra.mxu0 0.0
      %346 = vmatprep.subr.mxu0 0.0
      %347 = vmatpush2.msra.mxu0 0.0
      %348 = vmatprep.subr.mxu0 0.0
      %349 = vmatpush2.msra.mxu0 0.0
      %350 = vmatprep.subr.mxu0 0.0
      %351 = vmatpush2.msra.mxu0 0.0
      %352 = vmatprep.subr.mxu0 0.0
      %353 = vmatpush2.msra.mxu0 0.0
      %354 = vmatprep.subr.mxu0 0.0
      %355 = vmatpush2.msra.mxu0 0.0
      %356 = vmatprep.subr.mxu0 0.0
      %357 = vmatpush2.msra.mxu0 0.0
      %358 = vmatprep.subr.mxu0 0.0
      %359 = vmatpush2.msra.mxu0 0.0
      %360 = vmatprep.subr.mxu0 0.0
      %361 = vmatpush2.msra.mxu0 0.0
      %362 = vmatprep.subr.mxu0 0.0
      %363 = vmatpush2.msra.mxu0 0.0
      %364 = vmatprep.mubr.f32.mxu0 0.0
      %365 = vmatmul.mubr.f32.gmra.mxu0 %v249
      %v366 = vpop.f32.mrf.mxu0
      %v367 = vadd.f32 0.0, %v366
      %v368 = vpop.f32.mrf.mxu0
      %369 = vmatprep.mubr.f32.mxu0 0.0
      %370 = vmatmul.mubr.f32.gmra.mxu0 %v250
      %v371 = vpop.f32.mrf.mxu0
      %v372 = vadd.f32 0.0, %v371
      %v373 = vpop.f32.mrf.mxu0
      %374 = vdwg.mxu0
      %375 = vmatprep.subr.mxu0 0.0
      %376 = vmatpush1.msra.mxu0 %v282
      %377 = vmatprep.subr.mxu0 0.0
      %378 = vmatpush1.msra.mxu0 %v281
      %379 = vmatprep.subr.mxu0 0.0
      %380 = vmatpush1.msra.mxu0 %v280
      %381 = vmatprep.subr.mxu0 0.0
      %382 = vmatpush1.msra.mxu0 %v279
      %383 = vmatprep.subr.mxu0 0.0
      %384 = vmatpush1.msra.mxu0 %v278
      %385 = vmatprep.subr.mxu0 0.0
      %386 = vmatpush1.msra.mxu0 %v277
      %387 = vmatprep.subr.mxu0 0.0
      %388 = vmatpush1.msra.mxu0 %v276
      %389 = vmatprep.subr.mxu0 0.0
      %390 = vmatpush1.msra.mxu0 %v275
      %391 = vmatprep.subr.mxu0 0.0
      %392 = vmatpush1.msra.mxu0 %v274
      %393 = vmatprep.subr.mxu0 0.0
      %394 = vmatpush1.msra.mxu0 %v273
      %395 = vmatprep.subr.mxu0 0.0
      %396 = vmatpush1.msra.mxu0 %v272
      %397 = vmatprep.subr.mxu0 0.0
      %398 = vmatpush1.msra.mxu0 %v271
      %399 = vmatprep.subr.mxu0 0.0
      %400 = vmatpush1.msra.mxu0 %v270
      %401 = vmatprep.subr.mxu0 0.0
      %402 = vmatpush1.msra.mxu0 %v269
      %403 = vmatprep.subr.mxu0 0.0
      %404 = vmatpush1.msra.mxu0 %v268
      %405 = vmatprep.subr.mxu0 0.0
      %406 = vmatpush1.msra.mxu0 %v267
      %407 = vmatprep.subr.mxu0 0.0
      %408 = vmatpush2.msra.mxu0 0.0
      %409 = vmatprep.subr.mxu0 0.0
      %410 = vmatpush2.msra.mxu0 0.0
      %411 = vmatprep.subr.mxu0 0.0
      %412 = vmatpush2.msra.mxu0 0.0
      %413 = vmatprep.subr.mxu0 0.0
      %414 = vmatpush2.msra.mxu0 0.0
      %415 = vmatprep.subr.mxu0 0.0
      %416 = vmatpush2.msra.mxu0 0.0
      %417 = vmatprep.subr.mxu0 0.0
      %418 = vmatpush2.msra.mxu0 0.0
      %419 = vmatprep.subr.mxu0 0.0
      %420 = vmatpush2.msra.mxu0 0.0
      %421 = vmatprep.subr.mxu0 0.0
      %422 = vmatpush2.msra.mxu0 0.0
      %423 = vmatprep.subr.mxu0 0.0
      %424 = vmatpush2.msra.mxu0 0.0
      %425 = vmatprep.subr.mxu0 0.0
      %426 = vmatpush2.msra.mxu0 0.0
      %427 = vmatprep.subr.mxu0 0.0
      %428 = vmatpush2.msra.mxu0 0.0
      %429 = vmatprep.subr.mxu0 0.0
      %430 = vmatpush2.msra.mxu0 0.0
      %431 = vmatprep.subr.mxu0 0.0
      %432 = vmatpush2.msra.mxu0 0.0
      %433 = vmatprep.subr.mxu0 0.0
      %434 = vmatpush2.msra.mxu0 0.0
      %435 = vmatprep.subr.mxu0 0.0
      %436 = vmatpush2.msra.mxu0 0.0
      %437 = vmatprep.subr.mxu0 0.0
      %438 = vmatpush2.msra.mxu0 0.0
      %439 = vmatprep.mubr.f32.mxu0 0.0
      %440 = vmatmul.mubr.f32.gmra.mxu0 %v259
      %v441 = vpop.f32.mrf.mxu0
      %v442 = vadd.f32 %v367, %v441
      %v443 = vpop.f32.mrf.mxu0
      %444 = vmatprep.mubr.f32.mxu0 0.0
      %445 = vmatmul.mubr.f32.gmra.mxu0 %v256
      %v446 = vpop.f32.mrf.mxu0
      %v447 = vadd.f32 %v372, %v446
      %v448 = vpop.f32.mrf.mxu0
      %449 = vdwg.mxu0
      %s450 = scalar_lea.vmem %s1, 256
      %v451 = vld [vmem:[%s450] sm:$0xff]
      %v452 = vld [vmem:[%s450 + $0x8] sm:$0xff]
      %v453 = vld [vmem:[%s450 + $0x10] sm:$0xff]
      %v454 = vld [vmem:[%s450 + $0x18] sm:$0xff]
      %v455 = vld [vmem:[%s450 + $0x20] sm:$0xff]
      %v456 = vld [vmem:[%s450 + $0x28] sm:$0xff]
      %v457 = vld [vmem:[%s450 + $0x30] sm:$0xff]
      %v458 = vld [vmem:[%s450 + $0x38] sm:$0xff]
      %v459 = vld [vmem:[%s450 + $0x40] sm:$0xff]
      %v460 = vld [vmem:[%s450 + $0x48] sm:$0xff]
      %v461 = vld [vmem:[%s450 + $0x50] sm:$0xff]
      %v462 = vld [vmem:[%s450 + $0x58] sm:$0xff]
      %v463 = vld [vmem:[%s450 + $0x60] sm:$0xff]
      %v464 = vld [vmem:[%s450 + $0x68] sm:$0xff]
      %v465 = vld [vmem:[%s450 + $0x70] sm:$0xff]
      %v466 = vld [vmem:[%s450 + $0x78] sm:$0xff]
      %467 = vmatprep.subr.mxu0 0.0
      %468 = vmatpush1.msra.mxu0 %v466
      %469 = vmatprep.subr.mxu0 0.0
      %470 = vmatpush1.msra.mxu0 %v465
      %471 = vmatprep.subr.mxu0 0.0
      %472 = vmatpush1.msra.mxu0 %v464
      %473 = vmatprep.subr.mxu0 0.0
      %474 = vmatpush1.msra.mxu0 %v463
      %475 = vmatprep.subr.mxu0 0.0
      %476 = vmatpush1.msra.mxu0 %v462
      %477 = vmatprep.subr.mxu0 0.0
      %478 = vmatpush1.msra.mxu0 %v461
      %479 = vmatprep.subr.mxu0 0.0
      %480 = vmatpush1.msra.mxu0 %v460
      %481 = vmatprep.subr.mxu0 0.0
      %482 = vmatpush1.msra.mxu0 %v459
      %483 = vmatprep.subr.mxu0 0.0
      %484 = vmatpush1.msra.mxu0 %v458
      %485 = vmatprep.subr.mxu0 0.0
      %486 = vmatpush1.msra.mxu0 %v457
      %487 = vmatprep.subr.mxu0 0.0
      %488 = vmatpush1.msra.mxu0 %v456
      %489 = vmatprep.subr.mxu0 0.0
      %490 = vmatpush1.msra.mxu0 %v455
      %491 = vmatprep.subr.mxu0 0.0
      %492 = vmatpush1.msra.mxu0 %v454
      %493 = vmatprep.subr.mxu0 0.0
      %494 = vmatpush1.msra.mxu0 %v453
      %495 = vmatprep.subr.mxu0 0.0
      %496 = vmatpush1.msra.mxu0 %v452
      %497 = vmatprep.subr.mxu0 0.0
      %498 = vmatpush1.msra.mxu0 %v451
      %499 = vmatprep.subr.mxu0 0.0
      %500 = vmatpush2.msra.mxu0 0.0
      %501 = vmatprep.subr.mxu0 0.0
      %502 = vmatpush2.msra.mxu0 0.0
      %503 = vmatprep.subr.mxu0 0.0
      %504 = vmatpush2.msra.mxu0 0.0
      %505 = vmatprep.subr.mxu0 0.0
      %506 = vmatpush2.msra.mxu0 0.0
      %507 = vmatprep.subr.mxu0 0.0
      %508 = vmatpush2.msra.mxu0 0.0
      %509 = vmatprep.subr.mxu0 0.0
      %510 = vmatpush2.msra.mxu0 0.0
      %511 = vmatprep.subr.mxu0 0.0
      %512 = vmatpush2.msra.mxu0 0.0
      %513 = vmatprep.subr.mxu0 0.0
      %514 = vmatpush2.msra.mxu0 0.0
      %515 = vmatprep.subr.mxu0 0.0
      %516 = vmatpush2.msra.mxu0 0.0
      %517 = vmatprep.subr.mxu0 0.0
      %518 = vmatpush2.msra.mxu0 0.0
      %519 = vmatprep.subr.mxu0 0.0
      %520 = vmatpush2.msra.mxu0 0.0
      %521 = vmatprep.subr.mxu0 0.0
      %522 = vmatpush2.msra.mxu0 0.0
      %523 = vmatprep.subr.mxu0 0.0
      %524 = vmatpush2.msra.mxu0 0.0
      %525 = vmatprep.subr.mxu0 0.0
      %526 = vmatpush2.msra.mxu0 0.0
      %527 = vmatprep.subr.mxu0 0.0
      %528 = vmatpush2.msra.mxu0 0.0
      %529 = vmatprep.subr.mxu0 0.0
      %530 = vmatpush2.msra.mxu0 0.0
      %531 = vmatprep.mubr.f32.mxu0 0.0
      %532 = vmatmul.mubr.f32.gmra.mxu0 %v263
      %v533 = vpop.f32.mrf.mxu0
      %v534 = vadd.f32 0.0, %v533
      %v535 = vpop.f32.mrf.mxu0
      %536 = vmatprep.mubr.f32.mxu0 0.0
      %537 = vmatmul.mubr.f32.gmra.mxu0 %v266
      %v538 = vpop.f32.mrf.mxu0
      %v539 = vadd.f32 0.0, %v538
      %v540 = vpop.f32.mrf.mxu0
      %541 = vdwg.mxu0
      %v542 = vadd.f32 %v442, %v534
      %v543 = vadd.f32 %v447, %v539
      %544 = vst [vmem:[%s227] sm:$0xff] %v542
      %545 = vst [vmem:[%s227 + $0x8] sm:$0xff] %v543
      %p546 = scmp.eq.s32.totalorder %s21, 0
      // Predicated region
      $region33: #{basic_block.7} parent=31 // pred_check
        %p547 = pneg %p546
      $region34: #{basic_block.7} parent=31 // pred_check_branch
        %549 = sbr.rel (%p547) target = $region36
      $region35: #{basic_block.7} parent=31 // pred_region
        %550 = vst [vmem:[%s232] sm:$0x3] 0.0
      $region36: #{basic_block.7} parent=31 // pred_fallthru
        _
      %v551 = vld [vmem:[%s232] sm:$0x1]
      %v552 = vadd.f32 %v542, %v543
      %v553 = vrot.slane %v552, 4
      %v554 = vadd.f32 %v552, %v553
      %v555 = vrot.slane %v554, 2
      %v556 = vadd.f32 %v554, %v555
      %v557 = vrot.slane %v556, 1
      %v558 = vadd.f32 %v556, %v557
      %v559 = vadd.f32 %v551, %v558
      %560 = vst [vmem:[%s232] sm:$0x1] %v559
      %v561 = vld [vmem:[%s232 + $0x1] sm:$0x1]
      %v562 = vmul.f32 %v542, %v542
      %v563 = vmul.f32 %v543, %v543
      %v564 = vadd.f32 %v562, %v563
      %v565 = vrot.slane %v564, 4
      %v566 = vadd.f32 %v564, %v565
      %v567 = vrot.slane %v566, 2
      %v568 = vadd.f32 %v566, %v567
      %v569 = vrot.slane %v568, 1
      %v570 = vadd.f32 %v568, %v569
      %v571 = vadd.f32 %v561, %v570
      %572 = vst [vmem:[%s232 + $0x1] sm:$0x1] %v571
      %s573 = sadd.s32 %s20, %s21
      %p574 = scmp.lt.s32.totalorder %s573, 1
      %s575 = scalar_select %p574, %s573, 1
      %s576 = smul.addr %s575, 2
      %s577 = smul.addr %s576, 8
      %s578 = scalar_lea.vmem %s3, %s577
      %p579 = scmp.lt.s32.totalorder %s20, 1
      %s580 = scalar_select %p579, %s20, 1
      %s581 = smul.addr %s580, 2
      %s582 = scalar_lea.vmem %s4, %s581
      // Predicated region
      $region37: #{basic_block.7} parent=31 // pred_check
        %p583 = pneg %p118
      $region38: #{basic_block.7} parent=31 // pred_check_branch
        %585 = sbr.rel (%p583) target = $region40
      $region39: #{basic_block.7} parent=31 // pred_region
        %s586 = sadd.s32 %s20, %s21
      $region40: #{basic_block.7} parent=31 // pred_fallthru
        _
      // Predicated region
      $region41: #{basic_block.7} parent=31 // pred_check
        %p587 = pneg %p144
      $region42: #{basic_block.7} parent=31 // pred_check_branch
        %589 = sbr.rel (%p587) target = $region44
      $region43: #{basic_block.7} parent=31 // pred_region
        _
      $region44: #{basic_block.7} parent=31 // pred_fallthru
        _
    $region32: #{basic_block.7} parent=5 // pred_fallthru
      _
    %p590 = scmp.le.s32.totalorder 2, %s11
    // Predicated region
    $region45: #{basic_block.7} parent=5 // pred_check
      %p591 = pneg %p590
    $region46: #{basic_block.7} parent=5 // pred_check_branch
      %593 = sbr.rel (%p591) target = $region48
    $region47: #{basic_block.7} parent=5 // pred_region
      %s594 = ssub.s32 %s11, 2
      // Predicated region
      $region49: #{basic_block.7} parent=47 // pred_check
        %p595 = pneg %p124
      $region50: #{basic_block.7} parent=47 // pred_check_branch
        %597 = sbr.rel (%p595) target = $region52
      $region51: #{basic_block.7} parent=47 // pred_region
        %s598 = sadd.s32 %s22, %s23
        %p599 = scmp.lt.s32.totalorder %s598, 1
        %s600 = scalar_select %p599, %s598, 1
        %s601 = smul.addr %s600, 2
        %s602 = smul.addr %s601, 8
        %s603 = scalar_lea.vmem %s3, %s602
      $region52: #{basic_block.7} parent=47 // pred_fallthru
        _
      // Predicated region
      $region53: #{basic_block.7} parent=47 // pred_check
        %p604 = pneg %p150
      $region54: #{basic_block.7} parent=47 // pred_check_branch
        %606 = sbr.rel (%p604) target = $region56
      $region55: #{basic_block.7} parent=47 // pred_region
        %p607 = scmp.lt.s32.totalorder %s22, 1
        %s608 = scalar_select %p607, %s22, 1
        %s609 = smul.addr %s608, 2
        %s610 = scalar_lea.vmem %s4, %s609
      $region56: #{basic_block.7} parent=47 // pred_fallthru
        _
    $region48: #{basic_block.7} parent=5 // pred_fallthru
      _
  $region6: #{basic_block.7} parent=0 // loop_footer
    %s15 = sadd.s32 1, %s11
  $region7: #{basic_block.7} parent=0 // loop_footer_branch
    %10 = sbr.rel target = $region3
  $region8: #{basic_block.7} parent=0 // loop_exit
    _

</llo_original>
